<compile_context>
chip_gen: v7x
topology: tpu7x:2x2x1
jax: 0.10.0
libtpu: 0.0.40
codegen_flags: <defaults>
</compile_context>

<pallas_src>
import jax
import jax.numpy as jnp
from jax import lax
from jax.experimental import pallas as pl
from jax.experimental.pallas import tpu as pltpu

K = 3            # conv kernel size
NEG_SLOPE = 0.1  # LeakyReLU negative slope


def _round_up(x, m):
    return ((x + m - 1) // m) * m


def _pick_batch_block(n, h, m_target=256):
    """Largest divisor B of n with B*h <= m_target (MXU M rows); prefer >= 2
    grid steps (keeps both v7x TensorCores busy) as long as M stays >= 128."""
    divs = [d for d in range(1, n + 1) if n % d == 0 and d * h <= m_target]
    if not divs:
        return 1
    best = max(divs)
    for d in sorted(divs, reverse=True):
        if n // d >= 2 and d * h >= 128:
            return d
    return best


def conv_block_kernel(x_ref, w_ref, o_ref, pad_ref):
    """One batch block per grid step; all layouts lane-dense.

    x_ref:   (B, H, W*Cin)        unpadded input slab (VMEM)
    w_ref:   (K, Kpad, W*Cout)    banded weight matrices, one per filter row
    o_ref:   (B, H, W*Cout)       lane-dense output slab
    pad_ref: (B, H+2, Kpad)       VMEM scratch holding the H-halo'd slab
    """
    B, Hp2, Kpad = pad_ref.shape
    H = Hp2 - 2
    WC = x_ref.shape[-1]
    Nout = o_ref.shape[-1]

    # Stage the H-halo'd, lane-aligned slab in VMEM.  Rows 0 / H+1 and lanes
    # >= W*Cin are the conv's zero padding.  Re-zeroed every step (cheap) so
    # correctness does not depend on program_id==0 running on this core when
    # the "parallel" batch axis is split across TensorCores.
    pad_ref[...] = jnp.zeros_like(pad_ref)
    pad_ref[:, 1:H + 1, :WC] = x_ref[...]

    # 3x3 conv (padding=1) == 3 MXU matmuls, one per filter row kh.  The width
    # offsets (kw), the width zero-padding and Cin are all folded into the
    # banded RHS; batch rows are stacked so M = B*H.
    def tap(kh):
        lhs = pad_ref[:, kh:kh + H, :].reshape(B * H, Kpad)
        return jnp.dot(lhs, w_ref[kh], preferred_element_type=jnp.float32)

    acc = tap(0) + tap(1) + tap(2)

    # LeakyReLU(0.1); single full-lane-width (multiple of 128) store.
    acc = jnp.where(acc > 0, acc, NEG_SLOPE * acc)
    o_ref[...] = acc.reshape(B, H, Nout).astype(o_ref.dtype)


def _banded_weights(w_hwio, out_w, k_pad):
    """Expand (KH, KW, Cin, Cout) filters into KH banded MXU-RHS matrices that
    consume UNPADDED width rows:

      wb[kh, p*Cin + ci, w*Cout + co] = w_hwio[kh, p - w + 1, ci, co]
                                        when 0 <= p - w + 1 < KW, else 0

    so the conv's width zero-padding (padding=1) is realized by the zero band
    edges, and one matmul of an unpadded row slab against wb[kh] produces all
    W output columns for filter row kh.  Rows [out_w*Cin, k_pad) are zero
    (contraction-axis alignment padding).
    """
    KH, KW, Cin, Cout = w_hwio.shape
    p = jnp.arange(out_w)[:, None]            # input (unpadded) width position
    w = jnp.arange(out_w)[None, :]            # output width position
    kw_idx = p - w + 1                        # (out_w, out_w)
    valid = (kw_idx >= 0) & (kw_idx < KW)
    kw_safe = jnp.clip(kw_idx, 0, KW - 1)
    w_k = jnp.transpose(w_hwio, (1, 0, 2, 3))                 # (KW, KH, Cin, Cout)
    g = w_k[kw_safe]                                          # (p, w, KH, Cin, Cout)
    g = jnp.where(valid[:, :, None, None, None], g, 0.0)
    wb = jnp.transpose(g, (2, 0, 3, 1, 4)).reshape(KH, out_w * Cin, out_w * Cout)
    if k_pad > out_w * Cin:
        wb = jnp.pad(wb, ((0, 0), (0, k_pad - out_w * Cin), (0, 0)))
    return wb


def conv_block_pallas(x_nhwc, w_hwio):
    """x_nhwc: (N, H, W, Cin) float32, w_hwio: (3, 3, Cin, Cout) float32."""
    N, H, W, Cin = x_nhwc.shape
    Cout = w_hwio.shape[-1]
    WC = W * Cin
    Kpad = _round_up(WC, 128)      # 128-aligned contraction axis
    Nout = W * Cout                # lane-dense output axis

    B = _pick_batch_block(N, H)
    assert N % B == 0

    # Unpadded lane-dense input slab: a free reshape, no jnp.pad / no extra
    # HBM round trip (halo handled in-kernel & in the banded weights).
    x_slab = x_nhwc.reshape(N, H, WC)

    # Banded weights built once, outside the grid, in the exact MXU RHS layout.
    wb = _banded_weights(w_hwio, W, Kpad)          # (K, Kpad, W*Cout)

    def call(weight_spec):
        return pl.pallas_call(
            conv_block_kernel,
            out_shape=jax.ShapeDtypeStruct((N, H, Nout), x_nhwc.dtype),
            grid_spec=pltpu.PrefetchScalarGridSpec(
                num_scalar_prefetch=0,
                grid=(N // B,),
                in_specs=[
                    pl.BlockSpec((B, H, WC), lambda g: (g, 0, 0)),
                    weight_spec,
                ],
                out_specs=pl.BlockSpec((B, H, Nout), lambda g: (g, 0, 0)),
                scratch_shapes=[pltpu.VMEM((B, H + 2, Kpad), jnp.float32)],
            ),
            compiler_params=pltpu.CompilerParams(
                # "parallel" batch axis: 2 TensorCores on v7x; on single-TC
                # v5e/v6e the serial steps cost ~0.35 us each (negligible).
                dimension_semantics=("parallel",)),
        )(x_slab, wb)

    try:
        # Constant index_map -> the weight block is never re-fetched after the
        # first step; single-buffer it so wb lives once in VMEM, not twice.
        out_slab = call(pl.BlockSpec((K, Kpad, Nout), lambda g: (0, 0, 0),
                                     pipeline_mode=pl.Buffered(1)))
    except Exception:
        # Fallback: default double-buffered weight spec (2x wb VMEM, always
        # supported) in case this JAX build rejects Buffered(1) here.
        out_slab = call(pl.BlockSpec((K, Kpad, Nout), lambda g: (0, 0, 0)))

    return out_slab.reshape(N, H, W, Cout)


def conv_block_reference(x_nhwc, w_hwio):
    y = lax.conv_general_dilated(
        x_nhwc, w_hwio,
        window_strides=(1, 1),
        padding=((1, 1), (1, 1)),
        dimension_numbers=("NHWC", "HWIO", "NHWC"),
    )
    return jnp.where(y > 0, y, NEG_SLOPE * y)


if __name__ == "__main__":
    # Module constants: in_channel = 12; pick out_channel = 16; small spatial.
    N, Cin, Cout, H, W = 2, 12, 16, 16, 16

    key = jax.random.PRNGKey(0)
    kx, kw = jax.random.split(key)

    # PyTorch-native layouts, then convert.
    x_nchw = jax.random.normal(kx, (N, Cin, H, W), dtype=jnp.float32)
    # nn.Conv2d weight shape: (Cout, Cin, 3, 3); deterministic init.
    w_oihw = 0.1 * jax.random.normal(kw, (Cout, Cin, K, K), dtype=jnp.float32)

    x_nhwc = jnp.transpose(x_nchw, (0, 2, 3, 1))    # NCHW -> NHWC
    w_hwio = jnp.transpose(w_oihw, (2, 3, 1, 0))    # OIHW -> HWIO

    y_nhwc = jax.block_until_ready(conv_block_pallas(x_nhwc, w_hwio))
    y_ref = jax.block_until_ready(conv_block_reference(x_nhwc, w_hwio))

    # Back to the PyTorch NCHW convention for the final result.
    y_nchw = jnp.transpose(y_nhwc, (0, 3, 1, 2))
    assert y_nchw.shape == (N, Cout, H, W)

    err = float(jnp.max(jnp.abs(y_nhwc - y_ref)))
    if err < 1e-4:
        print("KERNEL_OK")
    else:
        print(f"MISMATCH max_abs_err={err}")
</pallas_src>

<mosaic_0001>
module attributes {stable_mosaic.version = 11 : i64} {
  func.func @conv_block_kernel(%arg0: i32, %arg1: memref<2x16x192xf32, #tpu.memory_space<vmem>>, %arg2: memref<3x256x256xf32, #tpu.memory_space<vmem>>, %arg3: memref<2x16x256xf32, #tpu.memory_space<vmem>>, %arg4: memref<2x18x256xf32, #tpu.memory_space<vmem>>) attributes {dimension_semantics = [#tpu.dimension_semantics<parallel>], iteration_bounds = array<i64: 1>, scalar_prefetch = 0 : i64, scratch_operands = 1 : i64, tpu.core_type = #tpu.core_type<tc>, window_params = [{transform_indices = @transform_0, window_bounds = array<i64: 2, 16, 192>}, {pipeline_mode = #tpu.pipeline_mode<synchronous>, transform_indices = @transform_1, window_bounds = array<i64: 3, 256, 256>}, {transform_indices = @transform_2, window_bounds = array<i64: 2, 16, 256>}]} {
    %cst = arith.constant 0.000000e+00 : f32
    %0 = vector.broadcast %cst : f32 to vector<2x18x256xf32>
    %c0 = arith.constant 0 : index
    %c0_0 = arith.constant 0 : index
    %c0_1 = arith.constant 0 : index
    %1 = vector.load %arg4[%c0, %c0_0, %c0_1] : memref<2x18x256xf32, #tpu.memory_space<vmem>>, vector<2x18x256xf32>
    tpu.vector_store %arg4[%c0, %c0_0, %c0_1], %0 {strides = array<i32>} : memref<2x18x256xf32, #tpu.memory_space<vmem>>, vector<2x18x256xf32>,
    %c0_2 = arith.constant 0 : index
    %c0_3 = arith.constant 0 : index
    %c0_4 = arith.constant 0 : index
    %2 = vector.load %arg1[%c0_2, %c0_3, %c0_4] : memref<2x16x192xf32, #tpu.memory_space<vmem>>, vector<2x16x192xf32>
    %c0_5 = arith.constant 0 : index
    %c1 = arith.constant 1 : index
    %c0_6 = arith.constant 0 : index
    %3 = vector.load %arg4[%c0_5, %c1, %c0_6] : memref<2x18x256xf32, #tpu.memory_space<vmem>>, vector<2x16x192xf32>
    tpu.vector_store %arg4[%c0_5, %c1, %c0_6], %2 {strides = array<i32>} : memref<2x18x256xf32, #tpu.memory_space<vmem>>, vector<2x16x192xf32>,
    %c0_7 = arith.constant 0 : index
    %c0_8 = arith.constant 0 : index
    %c0_9 = arith.constant 0 : index
    %4 = vector.load %arg4[%c0_7, %c0_8, %c0_9] : memref<2x18x256xf32, #tpu.memory_space<vmem>>, vector<2x16x256xf32>
    %5 = vector.shape_cast %4 : vector<2x16x256xf32> to vector<32x256xf32>
    %c0_10 = arith.constant 0 : index
    %c0_11 = arith.constant 0 : index
    %c0_12 = arith.constant 0 : index
    %6 = vector.load %arg2[%c0_10, %c0_11, %c0_12] : memref<3x256x256xf32, #tpu.memory_space<vmem>>, vector<1x256x256xf32>
    %7 = vector.shape_cast %6 : vector<1x256x256xf32> to vector<256x256xf32>
    %cst_13 = arith.constant dense<0.000000e+00> : vector<32x256xf32>
    %8 = tpu.matmul %5, %7, %cst_13 {dimension_numbers = #tpu.dot_dimension_numbers<[1], [0], [0], [1], [0, 0, 1, 1], [], []>} : vector<32x256xf32>, vector<256x256xf32>, vector<32x256xf32> -> vector<32x256xf32>
    %c0_14 = arith.constant 0 : index
    %c1_15 = arith.constant 1 : index
    %c0_16 = arith.constant 0 : index
    %9 = vector.load %arg4[%c0_14, %c1_15, %c0_16] : memref<2x18x256xf32, #tpu.memory_space<vmem>>, vector<2x16x256xf32>
    %10 = vector.shape_cast %9 : vector<2x16x256xf32> to vector<32x256xf32>
    %c1_17 = arith.constant 1 : index
    %c0_18 = arith.constant 0 : index
    %c0_19 = arith.constant 0 : index
    %11 = vector.load %arg2[%c1_17, %c0_18, %c0_19] : memref<3x256x256xf32, #tpu.memory_space<vmem>>, vector<1x256x256xf32>
    %12 = vector.shape_cast %11 : vector<1x256x256xf32> to vector<256x256xf32>
    %cst_20 = arith.constant dense<0.000000e+00> : vector<32x256xf32>
    %13 = tpu.matmul %10, %12, %cst_20 {dimension_numbers = #tpu.dot_dimension_numbers<[1], [0], [0], [1], [0, 0, 1, 1], [], []>} : vector<32x256xf32>, vector<256x256xf32>, vector<32x256xf32> -> vector<32x256xf32>
    %14 = arith.addf %8, %13 : vector<32x256xf32>
    %c0_21 = arith.constant 0 : index
    %c2 = arith.constant 2 : index
    %c0_22 = arith.constant 0 : index
    %15 = vector.load %arg4[%c0_21, %c2, %c0_22] : memref<2x18x256xf32, #tpu.memory_space<vmem>>, vector<2x16x256xf32>
    %16 = vector.shape_cast %15 : vector<2x16x256xf32> to vector<32x256xf32>
    %c2_23 = arith.constant 2 : index
    %c0_24 = arith.constant 0 : index
    %c0_25 = arith.constant 0 : index
    %17 = vector.load %arg2[%c2_23, %c0_24, %c0_25] : memref<3x256x256xf32, #tpu.memory_space<vmem>>, vector<1x256x256xf32>
    %18 = vector.shape_cast %17 : vector<1x256x256xf32> to vector<256x256xf32>
    %cst_26 = arith.constant dense<0.000000e+00> : vector<32x256xf32>
    %19 = tpu.matmul %16, %18, %cst_26 {dimension_numbers = #tpu.dot_dimension_numbers<[1], [0], [0], [1], [0, 0, 1, 1], [], []>} : vector<32x256xf32>, vector<256x256xf32>, vector<32x256xf32> -> vector<32x256xf32>
    %20 = arith.addf %14, %19 : vector<32x256xf32>
    %cst_27 = arith.constant 0.000000e+00 : f32
    %21 = vector.broadcast %cst_27 : f32 to vector<32x256xf32>
    %22 = arith.cmpf ogt, %20, %21 : vector<32x256xf32>
    %cst_28 = arith.constant 1.000000e-01 : f32
    %23 = vector.broadcast %cst_28 : f32 to vector<32x256xf32>
    %24 = arith.mulf %23, %20 : vector<32x256xf32>
    %25 = arith.select %22, %20, %24 : vector<32x256xi1>, vector<32x256xf32>
    %26 = vector.shape_cast %25 : vector<32x256xf32> to vector<2x16x256xf32>
    %c0_29 = arith.constant 0 : index
    %c0_30 = arith.constant 0 : index
    %c0_31 = arith.constant 0 : index
    %27 = vector.load %arg3[%c0_29, %c0_30, %c0_31] : memref<2x16x256xf32, #tpu.memory_space<vmem>>, vector<2x16x256xf32>
    tpu.vector_store %arg3[%c0_29, %c0_30, %c0_31], %26 {strides = array<i32>} : memref<2x16x256xf32, #tpu.memory_space<vmem>>, vector<2x16x256xf32>,
    return
  }
  func.func @transform_0(%arg0: i32) -> (i32, i32, i32) {
    %c0_i32 = arith.constant 0 : i32
    %c0_i32_0 = arith.constant 0 : i32
    %c0_i32_1 = arith.constant 0 : i32
    return %arg0, %c0_i32, %c0_i32_0 : i32, i32, i32
  }
  func.func @transform_1(%arg0: i32) -> (i32, i32, i32) {
    %c0_i32 = arith.constant 0 : i32
    %c0_i32_0 = arith.constant 0 : i32
    %c0_i32_1 = arith.constant 0 : i32
    %c0_i32_2 = arith.constant 0 : i32
    return %c0_i32, %c0_i32_0, %c0_i32_1 : i32, i32, i32
  }
  func.func @transform_2(%arg0: i32) -> (i32, i32, i32) {
    %c0_i32 = arith.constant 0 : i32
    %c0_i32_0 = arith.constant 0 : i32
    %c0_i32_1 = arith.constant 0 : i32
    return %arg0, %c0_i32, %c0_i32_0 : i32, i32, i32
  }
}

module attributes {stable_mosaic.version = 11 : i64} {
  func.func @conv_block_kernel(%arg0: i32, %arg1: memref<2x16x192xf32, #tpu.memory_space<vmem>>, %arg2: memref<3x256x256xf32, #tpu.memory_space<vmem>>, %arg3: memref<2x16x256xf32, #tpu.memory_space<vmem>>, %arg4: memref<2x18x256xf32, #tpu.memory_space<vmem>>) attributes {dimension_semantics = [#tpu.dimension_semantics<parallel>], iteration_bounds = array<i64: 1>, scalar_prefetch = 0 : i64, scratch_operands = 1 : i64, tpu.core_type = #tpu.core_type<tc>, window_params = [{transform_indices = @transform_0, window_bounds = array<i64: 2, 16, 192>}, {pipeline_mode = #tpu.pipeline_mode<synchronous>, transform_indices = @transform_1, window_bounds = array<i64: 3, 256, 256>}, {transform_indices = @transform_2, window_bounds = array<i64: 2, 16, 256>}]} {
    %cst = arith.constant 0.000000e+00 : f32
    %0 = vector.broadcast %cst : f32 to vector<2x18x256xf32>
    %c0 = arith.constant 0 : index
    %c0_0 = arith.constant 0 : index
    %c0_1 = arith.constant 0 : index
    %1 = vector.load %arg4[%c0, %c0_0, %c0_1] : memref<2x18x256xf32, #tpu.memory_space<vmem>>, vector<2x18x256xf32>
    tpu.vector_store %arg4[%c0, %c0_0, %c0_1], %0 {strides = array<i32>} : memref<2x18x256xf32, #tpu.memory_space<vmem>>, vector<2x18x256xf32>,
    %c0_2 = arith.constant 0 : index
    %c0_3 = arith.constant 0 : index
    %c0_4 = arith.constant 0 : index
    %2 = vector.load %arg1[%c0_2, %c0_3, %c0_4] : memref<2x16x192xf32, #tpu.memory_space<vmem>>, vector<2x16x192xf32>
    %c0_5 = arith.constant 0 : index
    %c1 = arith.constant 1 : index
    %c0_6 = arith.constant 0 : index
    %3 = vector.load %arg4[%c0_5, %c1, %c0_6] : memref<2x18x256xf32, #tpu.memory_space<vmem>>, vector<2x16x192xf32>
    tpu.vector_store %arg4[%c0_5, %c1, %c0_6], %2 {strides = array<i32>} : memref<2x18x256xf32, #tpu.memory_space<vmem>>, vector<2x16x192xf32>,
    %c0_7 = arith.constant 0 : index
    %c0_8 = arith.constant 0 : index
    %c0_9 = arith.constant 0 : index
    %4 = vector.load %arg4[%c0_7, %c0_8, %c0_9] : memref<2x18x256xf32, #tpu.memory_space<vmem>>, vector<2x16x256xf32>
    %5 = vector.shape_cast %4 : vector<2x16x256xf32> to vector<32x256xf32>
    %c0_10 = arith.constant 0 : index
    %c0_11 = arith.constant 0 : index
    %c0_12 = arith.constant 0 : index
    %6 = vector.load %arg2[%c0_10, %c0_11, %c0_12] : memref<3x256x256xf32, #tpu.memory_space<vmem>>, vector<1x256x256xf32>
    %7 = vector.shape_cast %6 : vector<1x256x256xf32> to vector<256x256xf32>
    %cst_13 = arith.constant dense<0.000000e+00> : vector<32x256xf32>
    %8 = tpu.matmul %5, %7, %cst_13 {dimension_numbers = #tpu.dot_dimension_numbers<[1], [0], [0], [1], [0, 0, 1, 1], [], []>} : vector<32x256xf32>, vector<256x256xf32>, vector<32x256xf32> -> vector<32x256xf32>
    %c0_14 = arith.constant 0 : index
    %c1_15 = arith.constant 1 : index
    %c0_16 = arith.constant 0 : index
    %9 = vector.load %arg4[%c0_14, %c1_15, %c0_16] : memref<2x18x256xf32, #tpu.memory_space<vmem>>, vector<2x16x256xf32>
    %10 = vector.shape_cast %9 : vector<2x16x256xf32> to vector<32x256xf32>
    %c1_17 = arith.constant 1 : index
    %c0_18 = arith.constant 0 : index
    %c0_19 = arith.constant 0 : index
    %11 = vector.load %arg2[%c1_17, %c0_18, %c0_19] : memref<3x256x256xf32, #tpu.memory_space<vmem>>, vector<1x256x256xf32>
    %12 = vector.shape_cast %11 : vector<1x256x256xf32> to vector<256x256xf32>
    %cst_20 = arith.constant dense<0.000000e+00> : vector<32x256xf32>
    %13 = tpu.matmul %10, %12, %cst_20 {dimension_numbers = #tpu.dot_dimension_numbers<[1], [0], [0], [1], [0, 0, 1, 1], [], []>} : vector<32x256xf32>, vector<256x256xf32>, vector<32x256xf32> -> vector<32x256xf32>
    %14 = arith.addf %8, %13 : vector<32x256xf32>
    %c0_21 = arith.constant 0 : index
    %c2 = arith.constant 2 : index
    %c0_22 = arith.constant 0 : index
    %15 = vector.load %arg4[%c0_21, %c2, %c0_22] : memref<2x18x256xf32, #tpu.memory_space<vmem>>, vector<2x16x256xf32>
    %16 = vector.shape_cast %15 : vector<2x16x256xf32> to vector<32x256xf32>
    %c2_23 = arith.constant 2 : index
    %c0_24 = arith.constant 0 : index
    %c0_25 = arith.constant 0 : index
    %17 = vector.load %arg2[%c2_23, %c0_24, %c0_25] : memref<3x256x256xf32, #tpu.memory_space<vmem>>, vector<1x256x256xf32>
    %18 = vector.shape_cast %17 : vector<1x256x256xf32> to vector<256x256xf32>
    %cst_26 = arith.constant dense<0.000000e+00> : vector<32x256xf32>
    %19 = tpu.matmul %16, %18, %cst_26 {dimension_numbers = #tpu.dot_dimension_numbers<[1], [0], [0], [1], [0, 0, 1, 1], [], []>} : vector<32x256xf32>, vector<256x256xf32>, vector<32x256xf32> -> vector<32x256xf32>
    %20 = arith.addf %14, %19 : vector<32x256xf32>
    %cst_27 = arith.constant 0.000000e+00 : f32
    %21 = vector.broadcast %cst_27 : f32 to vector<32x256xf32>
    %22 = arith.cmpf ogt, %20, %21 : vector<32x256xf32>
    %cst_28 = arith.constant 1.000000e-01 : f32
    %23 = vector.broadcast %cst_28 : f32 to vector<32x256xf32>
    %24 = arith.mulf %23, %20 : vector<32x256xf32>
    %25 = arith.select %22, %20, %24 : vector<32x256xi1>, vector<32x256xf32>
    %26 = vector.shape_cast %25 : vector<32x256xf32> to vector<2x16x256xf32>
    %c0_29 = arith.constant 0 : index
    %c0_30 = arith.constant 0 : index
    %c0_31 = arith.constant 0 : index
    %27 = vector.load %arg3[%c0_29, %c0_30, %c0_31] : memref<2x16x256xf32, #tpu.memory_space<vmem>>, vector<2x16x256xf32>
    tpu.vector_store %arg3[%c0_29, %c0_30, %c0_31], %26 {strides = array<i32>} : memref<2x16x256xf32, #tpu.memory_space<vmem>>, vector<2x16x256xf32>,
    return
  }
  func.func @transform_0(%arg0: i32) -> (i32, i32, i32) {
    %c0_i32 = arith.constant 0 : i32
    %c0_i32_0 = arith.constant 0 : i32
    %c0_i32_1 = arith.constant 0 : i32
    return %arg0, %c0_i32, %c0_i32_0 : i32, i32, i32
  }
  func.func @transform_1(%arg0: i32) -> (i32, i32, i32) {
    %c0_i32 = arith.constant 0 : i32
    %c0_i32_0 = arith.constant 0 : i32
    %c0_i32_1 = arith.constant 0 : i32
    %c0_i32_2 = arith.constant 0 : i32
    return %c0_i32, %c0_i32_0, %c0_i32_1 : i32, i32, i32
  }
  func.func @transform_2(%arg0: i32) -> (i32, i32, i32) {
    %c0_i32 = arith.constant 0 : i32
    %c0_i32_0 = arith.constant 0 : i32
    %c0_i32_1 = arith.constant 0 : i32
    return %arg0, %c0_i32, %c0_i32_0 : i32, i32, i32
  }
}

</mosaic_0001>

<llo_original>
// kernel: tpu_custom_call.1
$region0: #{tpu_custom_call.1}
  #allocation0 [shape = 'u32[]', space=smem, size = 0x4, offset = 0x4, fixed_abs, tag = 'smem constant byte address 0x4 - core index']
  #allocation1 [shape = 'u32[144,128]{1,0:T(1,128)}', space=vmem, size = 0x12000, scoped, tag = 'internal scratch']
  #allocation2 [shape = 'f32[2,18,256]{2,1,0:T(8,128)}', space=vmem, size = 0xc000, scoped, tag = 'scratch operand']
  %s0 = inlined_call_operand.hbm [shape: f32[2,16,192], index: 0, kind: input, shape index: {}]
  %s1 = inlined_call_operand.hbm [shape: f32[3,256,256], index: 1, kind: input, shape index: {}]
  %s2 = inlined_call_operand.hbm [shape: f32[2,16,256], index: 2, kind: output, shape index: {}]
  %s3 = sld [smem:[#allocation0]]
  $region26: #{tpu_custom_call.1} parent=0
    _
  %s5 = ssub.s32 1, %s3
  %s6 = scalar_select 0, %s5, %s3
  $region1: #{tpu_custom_call.1} parent=0
    #allocation3 [shape = 'u8[32768]{0}', space=vmem, size = 0x8000, scoped, tag = 'input window, operand 0, single buffered']
    #allocation4 [shape = 's32[1]{0}', space=sflag, size = 0x4, scoped, tag = 'scoped memory for tpu_custom_call.1']
    #allocation5 [shape = 's32[1]{0}', space=sflag, size = 0x4, scoped, tag = 'scoped memory for tpu_custom_call.1']
    #allocation6 [shape = 'u8[786432]{0}', space=vmem, size = 0xc0000, scoped, tag = 'input window, operand 1, single buffered']
    #allocation7 [shape = 's32[1]{0}', space=sflag, size = 0x4, scoped, tag = 'scoped memory for tpu_custom_call.1']
    #allocation8 [shape = 'u8[32768]{0}', space=vmem, size = 0x8000, scoped, tag = 'output window, operand 0, single buffered']
    %7 = vsyncpa [#allocation4], 0
    %8 = vsyncpa [#allocation7], 0
    %9 = vsyncpa [#allocation5], 0
    // Predicated region
    $region2: #{tpu_custom_call.1} parent=1 // pred_check
      _
    $region3: #{tpu_custom_call.1} parent=1 // pred_check_branch
      %11 = sbr.rel (0) target = $region5
    $region4: #{tpu_custom_call.1} parent=1 // pred_region
      %s13 = ssub.s32 1024, 1024
      %14 = vsyncadd [#allocation4], %s13
      %s15 = sshll.u32 [#allocation3], 4
      %s16 = int_to_ptr.vmem [resolvable:$true] %s15
      %21 = dma.hbm_to_vmem [thread:$0]  %s0, 1024, %s16, [#allocation4], 256, 256, 16
    $region5: #{tpu_custom_call.1} parent=1 // pred_fallthru
      _
    // Predicated region
    $region6: #{tpu_custom_call.1} parent=1 // pred_check
      _
    $region7: #{tpu_custom_call.1} parent=1 // pred_check_branch
      %23 = sbr.rel (0) target = $region9
    $region8: #{tpu_custom_call.1} parent=1 // pred_region
      %s25 = ssub.s32 24576, 24576
      %26 = vsyncadd [#allocation7], %s25
      %s27 = sshll.u32 [#allocation6], 4
      %s28 = int_to_ptr.vmem [resolvable:$true] %s27
      %33 = dma.hbm_to_vmem [thread:$0]  %s1, 24576, %s28, [#allocation7], 256, 256, 16
    $region9: #{tpu_custom_call.1} parent=1 // pred_fallthru
      _
    // Predicated region
    $region10: #{tpu_custom_call.1} parent=1 // pred_check
      _
    $region11: #{tpu_custom_call.1} parent=1 // pred_check_branch
      %35 = sbr.rel (0) target = $region13
    $region12: #{tpu_custom_call.1} parent=1 // pred_region
      %36 = dma.done [#allocation4], 1024
    $region13: #{tpu_custom_call.1} parent=1 // pred_fallthru
      _
    // Predicated region
    $region14: #{tpu_custom_call.1} parent=1 // pred_check
      _
    $region15: #{tpu_custom_call.1} parent=1 // pred_check_branch
      %38 = sbr.rel (0) target = $region17
    $region16: #{tpu_custom_call.1} parent=1 // pred_region
      %39 = dma.done [#allocation7], 24576
    $region17: #{tpu_custom_call.1} parent=1 // pred_fallthru
      _
    %40 = vst [vmem:[#allocation2] sm:$0xff] 0.0
    %41 = vst [vmem:[#allocation2 + $0x8] sm:$0xff] 0.0
    %42 = vst [vmem:[#allocation2 + $0x10] sm:$0xff] 0.0
    %43 = vst [vmem:[#allocation2 + $0x18] sm:$0xff] 0.0
    %44 = vst [vmem:[#allocation2 + $0x20] sm:$0x3] 0.0
    %45 = vst [vmem:[#allocation2 + $0x28] sm:$0x3] 0.0
    %46 = vst [vmem:[#allocation2 + $0x30] sm:$0xff] 0.0
    %47 = vst [vmem:[#allocation2 + $0x38] sm:$0xff] 0.0
    %48 = vst [vmem:[#allocation2 + $0x40] sm:$0xff] 0.0
    %49 = vst [vmem:[#allocation2 + $0x48] sm:$0xff] 0.0
    %50 = vst [vmem:[#allocation2 + $0x50] sm:$0x3] 0.0
    %51 = vst [vmem:[#allocation2 + $0x58] sm:$0x3] 0.0
    %v52 = vld [vmem:[#allocation3] sm:$0xff]
    %v53 = vld [vmem:[#allocation3 + $0x8] sm:$0xff]
    %v54 = vld [vmem:[#allocation3 + $0x10] sm:$0xff]
    %v55 = vld [vmem:[#allocation3 + $0x18] sm:$0xff]
    %v56 = vld [vmem:[#allocation3 + $0x20] sm:$0xff]
    %v57 = vld [vmem:[#allocation3 + $0x28] sm:$0xff]
    %v58 = vld [vmem:[#allocation3 + $0x30] sm:$0xff]
    %v59 = vld [vmem:[#allocation3 + $0x38] sm:$0xff]
    %vm68 = vcmask 1040384
    %v69 = vrot.slane %v52, 7
    %v70 = vrot.slane %v53, 7
    %v71 = vrot.slane %v54, 7
    %v72 = vsel %vm68, %v69, %v71
    %v73 = vrot.slane %v55, 7
    %v74 = vsel %vm68, %v70, %v73
    %v75 = vrot.slane %v56, 7
    %v76 = vrot.slane %v57, 7
    %v77 = vrot.slane %v58, 7
    %v78 = vsel %vm68, %v75, %v77
    %v79 = vrot.slane %v59, 7
    %v80 = vsel %vm68, %v76, %v79
    %93 = vst [vmem:[#allocation2] sm:$0xfe] %v69
    %vm94 = vcmask 523265
    %95 = vst.msk [vmem:[#allocation2 + $0x8] sm:$0xfe] %vm94, %v70
    %96 = vst [vmem:[#allocation2 + $0x10] sm:$0xff] %v72
    %vm97 = vcmask 523264
    %98 = vst.msk [vmem:[#allocation2 + $0x18] sm:$0xff] %vm97, %v74
    %99 = vst [vmem:[#allocation2 + $0x20] sm:$0x1] %v71
    %vm100 = vcmask 516096
    %101 = vst.msk [vmem:[#allocation2 + $0x28] sm:$0x1] %vm100, %v73
    %102 = vst [vmem:[#allocation2 + $0x30] sm:$0xfe] %v75
    %103 = vst.msk [vmem:[#allocation2 + $0x38] sm:$0xfe] %vm94, %v76
    %104 = vst [vmem:[#allocation2 + $0x40] sm:$0xff] %v78
    %105 = vst.msk [vmem:[#allocation2 + $0x48] sm:$0xff] %vm97, %v80
    %106 = vst [vmem:[#allocation2 + $0x50] sm:$0x1] %v77
    %107 = vst.msk [vmem:[#allocation2 + $0x58] sm:$0x1] %vm100, %v79
    %v108 = vld [vmem:[#allocation2] sm:$0xff]
    %v109 = vld [vmem:[#allocation2 + $0x8] sm:$0xff]
    %v110 = vld [vmem:[#allocation2 + $0x10] sm:$0xff]
    %v111 = vld [vmem:[#allocation2 + $0x18] sm:$0xff]
    %v112 = vld [vmem:[#allocation2 + $0x30] sm:$0xff]
    %v113 = vld [vmem:[#allocation2 + $0x38] sm:$0xff]
    %v114 = vld [vmem:[#allocation2 + $0x40] sm:$0xff]
    %v115 = vld [vmem:[#allocation2 + $0x48] sm:$0xff]
    %v116 = vld [vmem:[#allocation6] sm:$0xff]
    %v117 = vld [vmem:[#allocation6 + $0x8] sm:$0xff]
    %v118 = vld [vmem:[#allocation6 + $0x10] sm:$0xff]
    %v119 = vld [vmem:[#allocation6 + $0x18] sm:$0xff]
    %v120 = vld [vmem:[#allocation6 + $0x20] sm:$0xff]
    %v121 = vld [vmem:[#allocation6 + $0x28] sm:$0xff]
    %v122 = vld [vmem:[#allocation6 + $0x30] sm:$0xff]
    %v123 = vld [vmem:[#allocation6 + $0x38] sm:$0xff]
    %v124 = vld [vmem:[#allocation6 + $0x40] sm:$0xff]
    %v125 = vld [vmem:[#allocation6 + $0x48] sm:$0xff]
    %v126 = vld [vmem:[#allocation6 + $0x50] sm:$0xff]
    %v127 = vld [vmem:[#allocation6 + $0x58] sm:$0xff]
    %v128 = vld [vmem:[#allocation6 + $0x60] sm:$0xff]
    %v129 = vld [vmem:[#allocation6 + $0x68] sm:$0xff]
    %v130 = vld [vmem:[#allocation6 + $0x70] sm:$0xff]
    %v131 = vld [vmem:[#allocation6 + $0x78] sm:$0xff]
    %v132 = vld [vmem:[#allocation6 + $0x80] sm:$0xff]
    %v133 = vld [vmem:[#allocation6 + $0x88] sm:$0xff]
    %v134 = vld [vmem:[#allocation6 + $0x90] sm:$0xff]
    %v135 = vld [vmem:[#allocation6 + $0x98] sm:$0xff]
    %v136 = vld [vmem:[#allocation6 + $0xa0] sm:$0xff]
    %v137 = vld [vmem:[#allocation6 + $0xa8] sm:$0xff]
    %v138 = vld [vmem:[#allocation6 + $0xb0] sm:$0xff]
    %v139 = vld [vmem:[#allocation6 + $0xb8] sm:$0xff]
    %v140 = vld [vmem:[#allocation6 + $0xc0] sm:$0xff]
    %v141 = vld [vmem:[#allocation6 + $0xc8] sm:$0xff]
    %v142 = vld [vmem:[#allocation6 + $0xd0] sm:$0xff]
    %v143 = vld [vmem:[#allocation6 + $0xd8] sm:$0xff]
    %v144 = vld [vmem:[#allocation6 + $0xe0] sm:$0xff]
    %v145 = vld [vmem:[#allocation6 + $0xe8] sm:$0xff]
    %v146 = vld [vmem:[#allocation6 + $0xf0] sm:$0xff]
    %v147 = vld [vmem:[#allocation6 + $0xf8] sm:$0xff]
    %v148 = vld [vmem:[#allocation6 + $0x100] sm:$0xff]
    %v149 = vld [vmem:[#allocation6 + $0x108] sm:$0xff]
    %v150 = vld [vmem:[#allocation6 + $0x110] sm:$0xff]
    %v151 = vld [vmem:[#allocation6 + $0x118] sm:$0xff]
    %v152 = vld [vmem:[#allocation6 + $0x120] sm:$0xff]
    %v153 = vld [vmem:[#allocation6 + $0x128] sm:$0xff]
    %v154 = vld [vmem:[#allocation6 + $0x130] sm:$0xff]
    %v155 = vld [vmem:[#allocation6 + $0x138] sm:$0xff]
    %v156 = vld [vmem:[#allocation6 + $0x140] sm:$0xff]
    %v157 = vld [vmem:[#allocation6 + $0x148] sm:$0xff]
    %v158 = vld [vmem:[#allocation6 + $0x150] sm:$0xff]
    %v159 = vld [vmem:[#allocation6 + $0x158] sm:$0xff]
    %v160 = vld [vmem:[#allocation6 + $0x160] sm:$0xff]
    %v161 = vld [vmem:[#allocation6 + $0x168] sm:$0xff]
    %v162 = vld [vmem:[#allocation6 + $0x170] sm:$0xff]
    %v163 = vld [vmem:[#allocation6 + $0x178] sm:$0xff]
    %v164 = vld [vmem:[#allocation6 + $0x180] sm:$0xff]
    %v165 = vld [vmem:[#allocation6 + $0x188] sm:$0xff]
    %v166 = vld [vmem:[#allocation6 + $0x190] sm:$0xff]
    %v167 = vld [vmem:[#allocation6 + $0x198] sm:$0xff]
    %v168 = vld [vmem:[#allocation6 + $0x1a0] sm:$0xff]
    %v169 = vld [vmem:[#allocation6 + $0x1a8] sm:$0xff]
    %v170 = vld [vmem:[#allocation6 + $0x1b0] sm:$0xff]
    %v171 = vld [vmem:[#allocation6 + $0x1b8] sm:$0xff]
    %v172 = vld [vmem:[#allocation6 + $0x1c0] sm:$0xff]
    %v173 = vld [vmem:[#allocation6 + $0x1c8] sm:$0xff]
    %v174 = vld [vmem:[#allocation6 + $0x1d0] sm:$0xff]
    %v175 = vld [vmem:[#allocation6 + $0x1d8] sm:$0xff]
    %v176 = vld [vmem:[#allocation6 + $0x1e0] sm:$0xff]
    %v177 = vld [vmem:[#allocation6 + $0x1e8] sm:$0xff]
    %v178 = vld [vmem:[#allocation6 + $0x1f0] sm:$0xff]
    %v179 = vld [vmem:[#allocation6 + $0x1f8] sm:$0xff]
    %v180 = vld [vmem:[#allocation2] sm:$0xfe]
    %v181 = vld [vmem:[#allocation2 + $0x8] sm:$0xfe]
    %v182 = vld [vmem:[#allocation2 + $0x20] sm:$0x1]
    %v183 = vld [vmem:[#allocation2 + $0x28] sm:$0x1]
    %v184 = vld [vmem:[#allocation2 + $0x30] sm:$0xfe]
    %v185 = vld [vmem:[#allocation2 + $0x38] sm:$0xfe]
    %v186 = vld [vmem:[#allocation2 + $0x50] sm:$0x1]
    %v187 = vld [vmem:[#allocation2 + $0x58] sm:$0x1]
    %vm200 = vcmask 1046528
    %v201 = vrot.slane %v180, 1
    %v202 = vrot.slane %v110, 1
    %v203 = vsel %vm200, %v201, %v202
    %v204 = vrot.slane %v181, 1
    %v205 = vrot.slane %v111, 1
    %v206 = vsel %vm200, %v204, %v205
    %v207 = vrot.slane %v182, 1
    %v208 = vsel %vm200, %v202, %v207
    %v209 = vrot.slane %v183, 1
    %v210 = vsel %vm200, %v205, %v209
    %v211 = vrot.slane %v184, 1
    %v212 = vrot.slane %v114, 1
    %v213 = vsel %vm200, %v211, %v212
    %v214 = vrot.slane %v185, 1
    %v215 = vrot.slane %v115, 1
    %v216 = vsel %vm200, %v214, %v215
    %v217 = vrot.slane %v186, 1
    %v218 = vsel %vm200, %v212, %v217
    %v219 = vrot.slane %v187, 1
    %v220 = vsel %vm200, %v215, %v219
    %s229 = scalar_lea.vmem [#allocation6], 512
    %v230 = vld [vmem:[%s229] sm:$0xff]
    %v231 = vld [vmem:[%s229 + $0x8] sm:$0xff]
    %v232 = vld [vmem:[%s229 + $0x10] sm:$0xff]
    %v233 = vld [vmem:[%s229 + $0x18] sm:$0xff]
    %v234 = vld [vmem:[%s229 + $0x20] sm:$0xff]
    %v235 = vld [vmem:[%s229 + $0x28] sm:$0xff]
    %v236 = vld [vmem:[%s229 + $0x30] sm:$0xff]
    %v237 = vld [vmem:[%s229 + $0x38] sm:$0xff]
    %v238 = vld [vmem:[%s229 + $0x40] sm:$0xff]
    %v239 = vld [vmem:[%s229 + $0x48] sm:$0xff]
    %v240 = vld [vmem:[%s229 + $0x50] sm:$0xff]
    %v241 = vld [vmem:[%s229 + $0x58] sm:$0xff]
    %v242 = vld [vmem:[%s229 + $0x60] sm:$0xff]
    %v243 = vld [vmem:[%s229 + $0x68] sm:$0xff]
    %v244 = vld [vmem:[%s229 + $0x70] sm:$0xff]
    %v245 = vld [vmem:[%s229 + $0x78] sm:$0xff]
    %v246 = vld [vmem:[%s229 + $0x80] sm:$0xff]
    %v247 = vld [vmem:[%s229 + $0x88] sm:$0xff]
    %v248 = vld [vmem:[%s229 + $0x90] sm:$0xff]
    %v249 = vld [vmem:[%s229 + $0x98] sm:$0xff]
    %v250 = vld [vmem:[%s229 + $0xa0] sm:$0xff]
    %v251 = vld [vmem:[%s229 + $0xa8] sm:$0xff]
    %v252 = vld [vmem:[%s229 + $0xb0] sm:$0xff]
    %v253 = vld [vmem:[%s229 + $0xb8] sm:$0xff]
    %v254 = vld [vmem:[%s229 + $0xc0] sm:$0xff]
    %v255 = vld [vmem:[%s229 + $0xc8] sm:$0xff]
    %v256 = vld [vmem:[%s229 + $0xd0] sm:$0xff]
    %v257 = vld [vmem:[%s229 + $0xd8] sm:$0xff]
    %v258 = vld [vmem:[%s229 + $0xe0] sm:$0xff]
    %v259 = vld [vmem:[%s229 + $0xe8] sm:$0xff]
    %v260 = vld [vmem:[%s229 + $0xf0] sm:$0xff]
    %v261 = vld [vmem:[%s229 + $0xf8] sm:$0xff]
    %v262 = vld [vmem:[%s229 + $0x100] sm:$0xff]
    %v263 = vld [vmem:[%s229 + $0x108] sm:$0xff]
    %v264 = vld [vmem:[%s229 + $0x110] sm:$0xff]
    %v265 = vld [vmem:[%s229 + $0x118] sm:$0xff]
    %v266 = vld [vmem:[%s229 + $0x120] sm:$0xff]
    %v267 = vld [vmem:[%s229 + $0x128] sm:$0xff]
    %v268 = vld [vmem:[%s229 + $0x130] sm:$0xff]
    %v269 = vld [vmem:[%s229 + $0x138] sm:$0xff]
    %v270 = vld [vmem:[%s229 + $0x140] sm:$0xff]
    %v271 = vld [vmem:[%s229 + $0x148] sm:$0xff]
    %v272 = vld [vmem:[%s229 + $0x150] sm:$0xff]
    %v273 = vld [vmem:[%s229 + $0x158] sm:$0xff]
    %v274 = vld [vmem:[%s229 + $0x160] sm:$0xff]
    %v275 = vld [vmem:[%s229 + $0x168] sm:$0xff]
    %v276 = vld [vmem:[%s229 + $0x170] sm:$0xff]
    %v277 = vld [vmem:[%s229 + $0x178] sm:$0xff]
    %v278 = vld [vmem:[%s229 + $0x180] sm:$0xff]
    %v279 = vld [vmem:[%s229 + $0x188] sm:$0xff]
    %v280 = vld [vmem:[%s229 + $0x190] sm:$0xff]
    %v281 = vld [vmem:[%s229 + $0x198] sm:$0xff]
    %v282 = vld [vmem:[%s229 + $0x1a0] sm:$0xff]
    %v283 = vld [vmem:[%s229 + $0x1a8] sm:$0xff]
    %v284 = vld [vmem:[%s229 + $0x1b0] sm:$0xff]
    %v285 = vld [vmem:[%s229 + $0x1b8] sm:$0xff]
    %v286 = vld [vmem:[%s229 + $0x1c0] sm:$0xff]
    %v287 = vld [vmem:[%s229 + $0x1c8] sm:$0xff]
    %v288 = vld [vmem:[%s229 + $0x1d0] sm:$0xff]
    %v289 = vld [vmem:[%s229 + $0x1d8] sm:$0xff]
    %v290 = vld [vmem:[%s229 + $0x1e0] sm:$0xff]
    %v291 = vld [vmem:[%s229 + $0x1e8] sm:$0xff]
    %v292 = vld [vmem:[%s229 + $0x1f0] sm:$0xff]
    %v293 = vld [vmem:[%s229 + $0x1f8] sm:$0xff]
    %294 = vmatprep.subr.mxu0 %v231
    %295 = vmatpush1.msra.mxu0 %v230
    %296 = vmatprep.subr.mxu0 %v233
    %297 = vmatpush1.msra.mxu0 %v232
    %298 = vmatprep.subr.mxu0 %v235
    %299 = vmatpush1.msra.mxu0 %v234
    %300 = vmatprep.subr.mxu0 %v237
    %301 = vmatpush1.msra.mxu0 %v236
    %302 = vmatprep.subr.mxu0 %v239
    %303 = vmatpush1.msra.mxu0 %v238
    %304 = vmatprep.subr.mxu0 %v241
    %305 = vmatpush1.msra.mxu0 %v240
    %306 = vmatprep.subr.mxu0 %v243
    %307 = vmatpush1.msra.mxu0 %v242
    %308 = vmatprep.subr.mxu0 %v245
    %309 = vmatpush1.msra.mxu0 %v244
    %310 = vmatprep.subr.mxu0 %v247
    %311 = vmatpush1.msra.mxu0 %v246
    %312 = vmatprep.subr.mxu0 %v249
    %313 = vmatpush1.msra.mxu0 %v248
    %314 = vmatprep.subr.mxu0 %v251
    %315 = vmatpush1.msra.mxu0 %v250
    %316 = vmatprep.subr.mxu0 %v253
    %317 = vmatpush1.msra.mxu0 %v252
    %318 = vmatprep.subr.mxu0 %v255
    %319 = vmatpush1.msra.mxu0 %v254
    %320 = vmatprep.subr.mxu0 %v257
    %321 = vmatpush1.msra.mxu0 %v256
    %322 = vmatprep.subr.mxu0 %v259
    %323 = vmatpush1.msra.mxu0 %v258
    %324 = vmatprep.subr.mxu0 %v261
    %325 = vmatpush1.msra.mxu0 %v260
    %326 = vmatprep.subr.mxu0 %v263
    %327 = vmatpush1.msra.mxu0 %v262
    %328 = vmatprep.subr.mxu0 %v265
    %329 = vmatpush1.msra.mxu0 %v264
    %330 = vmatprep.subr.mxu0 %v267
    %331 = vmatpush1.msra.mxu0 %v266
    %332 = vmatprep.subr.mxu0 %v269
    %333 = vmatpush1.msra.mxu0 %v268
    %334 = vmatprep.subr.mxu0 %v271
    %335 = vmatpush1.msra.mxu0 %v270
    %336 = vmatprep.subr.mxu0 %v273
    %337 = vmatpush1.msra.mxu0 %v272
    %338 = vmatprep.subr.mxu0 %v275
    %339 = vmatpush1.msra.mxu0 %v274
    %340 = vmatprep.subr.mxu0 %v277
    %341 = vmatpush1.msra.mxu0 %v276
    %342 = vmatprep.subr.mxu0 %v279
    %343 = vmatpush1.msra.mxu0 %v278
    %344 = vmatprep.subr.mxu0 %v281
    %345 = vmatpush1.msra.mxu0 %v280
    %346 = vmatprep.subr.mxu0 %v283
    %347 = vmatpush1.msra.mxu0 %v282
    %348 = vmatprep.subr.mxu0 %v285
    %349 = vmatpush1.msra.mxu0 %v284
    %350 = vmatprep.subr.mxu0 %v287
    %351 = vmatpush1.msra.mxu0 %v286
    %352 = vmatprep.subr.mxu0 %v289
    %353 = vmatpush1.msra.mxu0 %v288
    %354 = vmatprep.subr.mxu0 %v291
    %355 = vmatpush1.msra.mxu0 %v290
    %356 = vmatprep.subr.mxu0 %v293
    %357 = vmatpush1.msra.mxu0 %v292
    %358 = vmatprep.mubr.f32.mxu0 %v206
    %359 = vmatmul.mubr.f32.gmra.mrb[0].mxu0 %v203
    %v360 = vpop.f32.mrb[0].mxu0
    %v361 = vadd.f32 0.0, %v360
    %v362 = vpop.f32.mrb[0].mxu0
    %v363 = vadd.f32 0.0, %v362
    %364 = vmatprep.mubr.f32.mxu0 %v210
    %365 = vmatmul.mubr.f32.gmra.mrb[0].mxu0 %v208
    %v366 = vpop.f32.mrb[0].mxu0
    %v367 = vadd.f32 0.0, %v366
    %v368 = vpop.f32.mrb[0].mxu0
    %v369 = vadd.f32 0.0, %v368
    %370 = vmatprep.mubr.f32.mxu0 %v216
    %371 = vmatmul.mubr.f32.gmra.mrb[0].mxu0 %v213
    %v372 = vpop.f32.mrb[0].mxu0
    %v373 = vadd.f32 0.0, %v372
    %v374 = vpop.f32.mrb[0].mxu0
    %v375 = vadd.f32 0.0, %v374
    %376 = vmatprep.mubr.f32.mxu0 %v220
    %377 = vmatmul.mubr.f32.gmra.mrb[0].mxu0 %v218
    %v378 = vpop.f32.mrb[0].mxu0
    %v379 = vadd.f32 0.0, %v378
    %v380 = vpop.f32.mrb[0].mxu0
    %v381 = vadd.f32 0.0, %v380
    %382 = vdwg.mxu0
    %383 = vmatprep.subr.mxu0 %v117
    %384 = vmatpush1.msra.mxu0 %v116
    %385 = vmatprep.subr.mxu0 %v119
    %386 = vmatpush1.msra.mxu0 %v118
    %387 = vmatprep.subr.mxu0 %v121
    %388 = vmatpush1.msra.mxu0 %v120
    %389 = vmatprep.subr.mxu0 %v123
    %390 = vmatpush1.msra.mxu0 %v122
    %391 = vmatprep.subr.mxu0 %v125
    %392 = vmatpush1.msra.mxu0 %v124
    %393 = vmatprep.subr.mxu0 %v127
    %394 = vmatpush1.msra.mxu0 %v126
    %395 = vmatprep.subr.mxu0 %v129
    %396 = vmatpush1.msra.mxu0 %v128
    %397 = vmatprep.subr.mxu0 %v131
    %398 = vmatpush1.msra.mxu0 %v130
    %399 = vmatprep.subr.mxu0 %v133
    %400 = vmatpush1.msra.mxu0 %v132
    %401 = vmatprep.subr.mxu0 %v135
    %402 = vmatpush1.msra.mxu0 %v134
    %403 = vmatprep.subr.mxu0 %v137
    %404 = vmatpush1.msra.mxu0 %v136
    %405 = vmatprep.subr.mxu0 %v139
    %406 = vmatpush1.msra.mxu0 %v138
    %407 = vmatprep.subr.mxu0 %v141
    %408 = vmatpush1.msra.mxu0 %v140
    %409 = vmatprep.subr.mxu0 %v143
    %410 = vmatpush1.msra.mxu0 %v142
    %411 = vmatprep.subr.mxu0 %v145
    %412 = vmatpush1.msra.mxu0 %v144
    %413 = vmatprep.subr.mxu0 %v147
    %414 = vmatpush1.msra.mxu0 %v146
    %415 = vmatprep.subr.mxu0 %v149
    %416 = vmatpush1.msra.mxu0 %v148
    %417 = vmatprep.subr.mxu0 %v151
    %418 = vmatpush1.msra.mxu0 %v150
    %419 = vmatprep.subr.mxu0 %v153
    %420 = vmatpush1.msra.mxu0 %v152
    %421 = vmatprep.subr.mxu0 %v155
    %422 = vmatpush1.msra.mxu0 %v154
    %423 = vmatprep.subr.mxu0 %v157
    %424 = vmatpush1.msra.mxu0 %v156
    %425 = vmatprep.subr.mxu0 %v159
    %426 = vmatpush1.msra.mxu0 %v158
    %427 = vmatprep.subr.mxu0 %v161
    %428 = vmatpush1.msra.mxu0 %v160
    %429 = vmatprep.subr.mxu0 %v163
    %430 = vmatpush1.msra.mxu0 %v162
    %431 = vmatprep.subr.mxu0 %v165
    %432 = vmatpush1.msra.mxu0 %v164
    %433 = vmatprep.subr.mxu0 %v167
    %434 = vmatpush1.msra.mxu0 %v166
    %435 = vmatprep.subr.mxu0 %v169
    %436 = vmatpush1.msra.mxu0 %v168
    %437 = vmatprep.subr.mxu0 %v171
    %438 = vmatpush1.msra.mxu0 %v170
    %439 = vmatprep.subr.mxu0 %v173
    %440 = vmatpush1.msra.mxu0 %v172
    %441 = vmatprep.subr.mxu0 %v175
    %442 = vmatpush1.msra.mxu0 %v174
    %443 = vmatprep.subr.mxu0 %v177
    %444 = vmatpush1.msra.mxu0 %v176
    %445 = vmatprep.subr.mxu0 %v179
    %446 = vmatpush1.msra.mxu0 %v178
    %447 = vmatprep.mubr.f32.mxu0 %v109
    %448 = vmatmul.mubr.f32.gmra.mrb[0].mxu0 %v108
    %v449 = vpop.f32.mrb[0].mxu0
    %v450 = vadd.f32 %v361, %v449
    %v451 = vpop.f32.mrb[0].mxu0
    %v452 = vadd.f32 %v363, %v451
    %453 = vmatprep.mubr.f32.mxu0 %v111
    %454 = vmatmul.mubr.f32.gmra.mrb[0].mxu0 %v110
    %v455 = vpop.f32.mrb[0].mxu0
    %v456 = vadd.f32 %v367, %v455
    %v457 = vpop.f32.mrb[0].mxu0
    %v458 = vadd.f32 %v369, %v457
    %459 = vmatprep.mubr.f32.mxu0 %v113
    %460 = vmatmul.mubr.f32.gmra.mrb[0].mxu0 %v112
    %v461 = vpop.f32.mrb[0].mxu0
    %v462 = vadd.f32 %v373, %v461
    %v463 = vpop.f32.mrb[0].mxu0
    %v464 = vadd.f32 %v375, %v463
    %465 = vmatprep.mubr.f32.mxu0 %v115
    %466 = vmatmul.mubr.f32.gmra.mrb[0].mxu0 %v114
    %v467 = vpop.f32.mrb[0].mxu0
    %v468 = vadd.f32 %v379, %v467
    %v469 = vpop.f32.mrb[0].mxu0
    %v470 = vadd.f32 %v381, %v469
    %471 = vdwg.mxu0
    %v472 = vld [vmem:[#allocation2] sm:$0xfc]
    %v473 = vld [vmem:[#allocation2 + $0x8] sm:$0xfc]
    %v474 = vld [vmem:[#allocation2 + $0x20] sm:$0x3]
    %v475 = vld [vmem:[#allocation2 + $0x28] sm:$0x3]
    %v476 = vld [vmem:[#allocation2 + $0x30] sm:$0xfc]
    %v477 = vld [vmem:[#allocation2 + $0x38] sm:$0xfc]
    %v478 = vld [vmem:[#allocation2 + $0x50] sm:$0x3]
    %v479 = vld [vmem:[#allocation2 + $0x58] sm:$0x3]
    %vm488 = vcmask 1045504
    %v489 = vrot.slane %v472, 2
    %v490 = vrot.slane %v110, 2
    %v491 = vsel %vm488, %v489, %v490
    %v492 = vrot.slane %v473, 2
    %v493 = vrot.slane %v111, 2
    %v494 = vsel %vm488, %v492, %v493
    %v495 = vrot.slane %v474, 2
    %v496 = vsel %vm488, %v490, %v495
    %v497 = vrot.slane %v475, 2
    %v498 = vsel %vm488, %v493, %v497
    %v499 = vrot.slane %v476, 2
    %v500 = vrot.slane %v114, 2
    %v501 = vsel %vm488, %v499, %v500
    %v502 = vrot.slane %v477, 2
    %v503 = vrot.slane %v115, 2
    %v504 = vsel %vm488, %v502, %v503
    %v505 = vrot.slane %v478, 2
    %v506 = vsel %vm488, %v500, %v505
    %v507 = vrot.slane %v479, 2
    %v508 = vsel %vm488, %v503, %v507
    %s517 = scalar_lea.vmem [#allocation6], 1024
    %v518 = vld [vmem:[%s517] sm:$0xff]
    %v519 = vld [vmem:[%s517 + $0x8] sm:$0xff]
    %v520 = vld [vmem:[%s517 + $0x10] sm:$0xff]
    %v521 = vld [vmem:[%s517 + $0x18] sm:$0xff]
    %v522 = vld [vmem:[%s517 + $0x20] sm:$0xff]
    %v523 = vld [vmem:[%s517 + $0x28] sm:$0xff]
    %v524 = vld [vmem:[%s517 + $0x30] sm:$0xff]
    %v525 = vld [vmem:[%s517 + $0x38] sm:$0xff]
    %v526 = vld [vmem:[%s517 + $0x40] sm:$0xff]
    %v527 = vld [vmem:[%s517 + $0x48] sm:$0xff]
    %v528 = vld [vmem:[%s517 + $0x50] sm:$0xff]
    %v529 = vld [vmem:[%s517 + $0x58] sm:$0xff]
    %v530 = vld [vmem:[%s517 + $0x60] sm:$0xff]
    %v531 = vld [vmem:[%s517 + $0x68] sm:$0xff]
    %v532 = vld [vmem:[%s517 + $0x70] sm:$0xff]
    %v533 = vld [vmem:[%s517 + $0x78] sm:$0xff]
    %v534 = vld [vmem:[%s517 + $0x80] sm:$0xff]
    %v535 = vld [vmem:[%s517 + $0x88] sm:$0xff]
    %v536 = vld [vmem:[%s517 + $0x90] sm:$0xff]
    %v537 = vld [vmem:[%s517 + $0x98] sm:$0xff]
    %v538 = vld [vmem:[%s517 + $0xa0] sm:$0xff]
    %v539 = vld [vmem:[%s517 + $0xa8] sm:$0xff]
    %v540 = vld [vmem:[%s517 + $0xb0] sm:$0xff]
    %v541 = vld [vmem:[%s517 + $0xb8] sm:$0xff]
    %v542 = vld [vmem:[%s517 + $0xc0] sm:$0xff]
    %v543 = vld [vmem:[%s517 + $0xc8] sm:$0xff]
    %v544 = vld [vmem:[%s517 + $0xd0] sm:$0xff]
    %v545 = vld [vmem:[%s517 + $0xd8] sm:$0xff]
    %v546 = vld [vmem:[%s517 + $0xe0] sm:$0xff]
    %v547 = vld [vmem:[%s517 + $0xe8] sm:$0xff]
    %v548 = vld [vmem:[%s517 + $0xf0] sm:$0xff]
    %v549 = vld [vmem:[%s517 + $0xf8] sm:$0xff]
    %v550 = vld [vmem:[%s517 + $0x100] sm:$0xff]
    %v551 = vld [vmem:[%s517 + $0x108] sm:$0xff]
    %v552 = vld [vmem:[%s517 + $0x110] sm:$0xff]
    %v553 = vld [vmem:[%s517 + $0x118] sm:$0xff]
    %v554 = vld [vmem:[%s517 + $0x120] sm:$0xff]
    %v555 = vld [vmem:[%s517 + $0x128] sm:$0xff]
    %v556 = vld [vmem:[%s517 + $0x130] sm:$0xff]
    %v557 = vld [vmem:[%s517 + $0x138] sm:$0xff]
    %v558 = vld [vmem:[%s517 + $0x140] sm:$0xff]
    %v559 = vld [vmem:[%s517 + $0x148] sm:$0xff]
    %v560 = vld [vmem:[%s517 + $0x150] sm:$0xff]
    %v561 = vld [vmem:[%s517 + $0x158] sm:$0xff]
    %v562 = vld [vmem:[%s517 + $0x160] sm:$0xff]
    %v563 = vld [vmem:[%s517 + $0x168] sm:$0xff]
    %v564 = vld [vmem:[%s517 + $0x170] sm:$0xff]
    %v565 = vld [vmem:[%s517 + $0x178] sm:$0xff]
    %v566 = vld [vmem:[%s517 + $0x180] sm:$0xff]
    %v567 = vld [vmem:[%s517 + $0x188] sm:$0xff]
    %v568 = vld [vmem:[%s517 + $0x190] sm:$0xff]
    %v569 = vld [vmem:[%s517 + $0x198] sm:$0xff]
    %v570 = vld [vmem:[%s517 + $0x1a0] sm:$0xff]
    %v571 = vld [vmem:[%s517 + $0x1a8] sm:$0xff]
    %v572 = vld [vmem:[%s517 + $0x1b0] sm:$0xff]
    %v573 = vld [vmem:[%s517 + $0x1b8] sm:$0xff]
    %v574 = vld [vmem:[%s517 + $0x1c0] sm:$0xff]
    %v575 = vld [vmem:[%s517 + $0x1c8] sm:$0xff]
    %v576 = vld [vmem:[%s517 + $0x1d0] sm:$0xff]
    %v577 = vld [vmem:[%s517 + $0x1d8] sm:$0xff]
    %v578 = vld [vmem:[%s517 + $0x1e0] sm:$0xff]
    %v579 = vld [vmem:[%s517 + $0x1e8] sm:$0xff]
    %v580 = vld [vmem:[%s517 + $0x1f0] sm:$0xff]
    %v581 = vld [vmem:[%s517 + $0x1f8] sm:$0xff]
    %582 = vmatprep.subr.mxu0 %v519
    %583 = vmatpush1.msra.mxu0 %v518
    %584 = vmatprep.subr.mxu0 %v521
    %585 = vmatpush1.msra.mxu0 %v520
    %586 = vmatprep.subr.mxu0 %v523
    %587 = vmatpush1.msra.mxu0 %v522
    %588 = vmatprep.subr.mxu0 %v525
    %589 = vmatpush1.msra.mxu0 %v524
    %590 = vmatprep.subr.mxu0 %v527
    %591 = vmatpush1.msra.mxu0 %v526
    %592 = vmatprep.subr.mxu0 %v529
    %593 = vmatpush1.msra.mxu0 %v528
    %594 = vmatprep.subr.mxu0 %v531
    %595 = vmatpush1.msra.mxu0 %v530
    %596 = vmatprep.subr.mxu0 %v533
    %597 = vmatpush1.msra.mxu0 %v532
    %598 = vmatprep.subr.mxu0 %v535
    %599 = vmatpush1.msra.mxu0 %v534
    %600 = vmatprep.subr.mxu0 %v537
    %601 = vmatpush1.msra.mxu0 %v536
    %602 = vmatprep.subr.mxu0 %v539
    %603 = vmatpush1.msra.mxu0 %v538
    %604 = vmatprep.subr.mxu0 %v541
    %605 = vmatpush1.msra.mxu0 %v540
    %606 = vmatprep.subr.mxu0 %v543
    %607 = vmatpush1.msra.mxu0 %v542
    %608 = vmatprep.subr.mxu0 %v545
    %609 = vmatpush1.msra.mxu0 %v544
    %610 = vmatprep.subr.mxu0 %v547
    %611 = vmatpush1.msra.mxu0 %v546
    %612 = vmatprep.subr.mxu0 %v549
    %613 = vmatpush1.msra.mxu0 %v548
    %614 = vmatprep.subr.mxu0 %v551
    %615 = vmatpush1.msra.mxu0 %v550
    %616 = vmatprep.subr.mxu0 %v553
    %617 = vmatpush1.msra.mxu0 %v552
    %618 = vmatprep.subr.mxu0 %v555
    %619 = vmatpush1.msra.mxu0 %v554
    %620 = vmatprep.subr.mxu0 %v557
    %621 = vmatpush1.msra.mxu0 %v556
    %622 = vmatprep.subr.mxu0 %v559
    %623 = vmatpush1.msra.mxu0 %v558
    %624 = vmatprep.subr.mxu0 %v561
    %625 = vmatpush1.msra.mxu0 %v560
    %626 = vmatprep.subr.mxu0 %v563
    %627 = vmatpush1.msra.mxu0 %v562
    %628 = vmatprep.subr.mxu0 %v565
    %629 = vmatpush1.msra.mxu0 %v564
    %630 = vmatprep.subr.mxu0 %v567
    %631 = vmatpush1.msra.mxu0 %v566
    %632 = vmatprep.subr.mxu0 %v569
    %633 = vmatpush1.msra.mxu0 %v568
    %634 = vmatprep.subr.mxu0 %v571
    %635 = vmatpush1.msra.mxu0 %v570
    %636 = vmatprep.subr.mxu0 %v573
    %637 = vmatpush1.msra.mxu0 %v572
    %638 = vmatprep.subr.mxu0 %v575
    %639 = vmatpush1.msra.mxu0 %v574
    %640 = vmatprep.subr.mxu0 %v577
    %641 = vmatpush1.msra.mxu0 %v576
    %642 = vmatprep.subr.mxu0 %v579
    %643 = vmatpush1.msra.mxu0 %v578
    %644 = vmatprep.subr.mxu0 %v581
    %645 = vmatpush1.msra.mxu0 %v580
    %646 = vmatprep.mubr.f32.mxu0 %v494
    %647 = vmatmul.mubr.f32.gmra.mrb[0].mxu0 %v491
    %v648 = vpop.f32.mrb[0].mxu0
    %v649 = vadd.f32 0.0, %v648
    %v650 = vpop.f32.mrb[0].mxu0
    %v651 = vadd.f32 0.0, %v650
    %652 = vmatprep.mubr.f32.mxu0 %v498
    %653 = vmatmul.mubr.f32.gmra.mrb[0].mxu0 %v496
    %v654 = vpop.f32.mrb[0].mxu0
    %v655 = vadd.f32 0.0, %v654
    %v656 = vpop.f32.mrb[0].mxu0
    %v657 = vadd.f32 0.0, %v656
    %658 = vmatprep.mubr.f32.mxu0 %v504
    %659 = vmatmul.mubr.f32.gmra.mrb[0].mxu0 %v501
    %v660 = vpop.f32.mrb[0].mxu0
    %v661 = vadd.f32 0.0, %v660
    %v662 = vpop.f32.mrb[0].mxu0
    %v663 = vadd.f32 0.0, %v662
    %664 = vmatprep.mubr.f32.mxu0 %v508
    %665 = vmatmul.mubr.f32.gmra.mrb[0].mxu0 %v506
    %v666 = vpop.f32.mrb[0].mxu0
    %v667 = vadd.f32 0.0, %v666
    %v668 = vpop.f32.mrb[0].mxu0
    %v669 = vadd.f32 0.0, %v668
    %670 = vdwg.mxu0
    %v671 = vadd.f32 %v450, %v649
    %v672 = vadd.f32 %v452, %v651
    %v673 = vadd.f32 %v456, %v655
    %v674 = vadd.f32 %v458, %v657
    %v675 = vadd.f32 %v462, %v661
    %v676 = vadd.f32 %v464, %v663
    %v677 = vadd.f32 %v468, %v667
    %v678 = vadd.f32 %v470, %v669
    %vm679 = vcmp.gt.f32.partialorder %v671, 0.0
    %vm680 = vcmp.gt.f32.partialorder %v672, 0.0
    %vm681 = vcmp.gt.f32.partialorder %v673, 0.0
    %vm682 = vcmp.gt.f32.partialorder %v674, 0.0
    %vm683 = vcmp.gt.f32.partialorder %v675, 0.0
    %vm684 = vcmp.gt.f32.partialorder %v676, 0.0
    %vm685 = vcmp.gt.f32.partialorder %v677, 0.0
    %vm686 = vcmp.gt.f32.partialorder %v678, 0.0
    %v687 = vmul.f32 %v671, 0.1
    %v688 = vmul.f32 %v672, 0.1
    %v689 = vmul.f32 %v673, 0.1
    %v690 = vmul.f32 %v674, 0.1
    %v691 = vmul.f32 %v675, 0.1
    %v692 = vmul.f32 %v676, 0.1
    %v693 = vmul.f32 %v677, 0.1
    %v694 = vmul.f32 %v678, 0.1
    %v695 = vsel %vm679, %v671, %v687
    %v696 = vsel %vm680, %v672, %v688
    %v697 = vsel %vm681, %v673, %v689
    %v698 = vsel %vm682, %v674, %v690
    %v699 = vsel %vm683, %v675, %v691
    %v700 = vsel %vm684, %v676, %v692
    %v701 = vsel %vm685, %v677, %v693
    %v702 = vsel %vm686, %v678, %v694
    %703 = vst [vmem:[#allocation8] sm:$0xff] %v695
    %704 = vst [vmem:[#allocation8 + $0x8] sm:$0xff] %v696
    %705 = vst [vmem:[#allocation8 + $0x10] sm:$0xff] %v697
    %706 = vst [vmem:[#allocation8 + $0x18] sm:$0xff] %v698
    %707 = vst [vmem:[#allocation8 + $0x20] sm:$0xff] %v699
    %708 = vst [vmem:[#allocation8 + $0x28] sm:$0xff] %v700
    %709 = vst [vmem:[#allocation8 + $0x30] sm:$0xff] %v701
    %710 = vst [vmem:[#allocation8 + $0x38] sm:$0xff] %v702
    // Predicated region
    $region18: #{tpu_custom_call.1} parent=1 // pred_check
      _
    $region19: #{tpu_custom_call.1} parent=1 // pred_check_branch
      %712 = sbr.rel (0) target = $region21
    $region20: #{tpu_custom_call.1} parent=1 // pred_region
      %s714 = ssub.s32 1024, 1024
      %715 = vsyncadd [#allocation5], %s714
      %s716 = sshll.u32 [#allocation8], 4
      %s717 = int_to_ptr.vmem [resolvable:$true] %s716
      %722 = dma.vmem_to_hbm [thread:$0]  %s717, 1024, %s2, [#allocation5], 256, 256, 16
    $region21: #{tpu_custom_call.1} parent=1 // pred_fallthru
      _
    // Predicated region
    $region22: #{tpu_custom_call.1} parent=1 // pred_check
      _
    $region23: #{tpu_custom_call.1} parent=1 // pred_check_branch
      %724 = sbr.rel (0) target = $region25
    $region24: #{tpu_custom_call.1} parent=1 // pred_region
      %725 = dma.done [#allocation5], 1024
    $region25: #{tpu_custom_call.1} parent=1 // pred_fallthru
      _
    %726 = vsyncpa [#allocation4], 1
    %727 = vsyncpa [#allocation7], 1
    %728 = vsyncpa [#allocation5], 1

// kernel: tpu_custom_call.1
$region0: #{tpu_custom_call.1}
  #allocation0 [shape = 'u32[]', space=smem, size = 0x4, offset = 0x4, fixed_abs, tag = 'smem constant byte address 0x4 - core index']
  #allocation1 [shape = 'u32[144,128]{1,0:T(1,128)}', space=vmem, size = 0x12000, scoped, tag = 'internal scratch']
  #allocation2 [shape = 'f32[2,18,256]{2,1,0:T(8,128)}', space=vmem, size = 0xc000, scoped, tag = 'scratch operand']
  %s0 = inlined_call_operand.hbm [shape: f32[2,16,192], index: 0, kind: input, shape index: {}]
  %s1 = inlined_call_operand.hbm [shape: f32[3,256,256], index: 1, kind: input, shape index: {}]
  %s2 = inlined_call_operand.hbm [shape: f32[2,16,256], index: 2, kind: output, shape index: {}]
  %s3 = sld [smem:[#allocation0]]
  $region26: #{tpu_custom_call.1} parent=0
    _
  %s5 = ssub.s32 1, %s3
  %s6 = scalar_select 0, %s5, %s3
  $region1: #{tpu_custom_call.1} parent=0
    #allocation3 [shape = 'u8[32768]{0}', space=vmem, size = 0x8000, scoped, tag = 'input window, operand 0, single buffered']
    #allocation4 [shape = 's32[1]{0}', space=sflag, size = 0x4, scoped, tag = 'scoped memory for tpu_custom_call.1']
    #allocation5 [shape = 's32[1]{0}', space=sflag, size = 0x4, scoped, tag = 'scoped memory for tpu_custom_call.1']
    #allocation6 [shape = 'u8[786432]{0}', space=vmem, size = 0xc0000, scoped, tag = 'input window, operand 1, single buffered']
    #allocation7 [shape = 's32[1]{0}', space=sflag, size = 0x4, scoped, tag = 'scoped memory for tpu_custom_call.1']
    #allocation8 [shape = 'u8[32768]{0}', space=vmem, size = 0x8000, scoped, tag = 'output window, operand 0, single buffered']
    %7 = vsyncpa [#allocation4], 0
    %8 = vsyncpa [#allocation7], 0
    %9 = vsyncpa [#allocation5], 0
    // Predicated region
    $region2: #{tpu_custom_call.1} parent=1 // pred_check
      _
    $region3: #{tpu_custom_call.1} parent=1 // pred_check_branch
      %11 = sbr.rel (0) target = $region5
    $region4: #{tpu_custom_call.1} parent=1 // pred_region
      %s13 = ssub.s32 1024, 1024
      %14 = vsyncadd [#allocation4], %s13
      %s15 = sshll.u32 [#allocation3], 4
      %s16 = int_to_ptr.vmem [resolvable:$true] %s15
      %21 = dma.hbm_to_vmem [thread:$0]  %s0, 1024, %s16, [#allocation4], 256, 256, 16
    $region5: #{tpu_custom_call.1} parent=1 // pred_fallthru
      _
    // Predicated region
    $region6: #{tpu_custom_call.1} parent=1 // pred_check
      _
    $region7: #{tpu_custom_call.1} parent=1 // pred_check_branch
      %23 = sbr.rel (0) target = $region9
    $region8: #{tpu_custom_call.1} parent=1 // pred_region
      %s25 = ssub.s32 24576, 24576
      %26 = vsyncadd [#allocation7], %s25
      %s27 = sshll.u32 [#allocation6], 4
      %s28 = int_to_ptr.vmem [resolvable:$true] %s27
      %33 = dma.hbm_to_vmem [thread:$0]  %s1, 24576, %s28, [#allocation7], 256, 256, 16
    $region9: #{tpu_custom_call.1} parent=1 // pred_fallthru
      _
    // Predicated region
    $region10: #{tpu_custom_call.1} parent=1 // pred_check
      _
    $region11: #{tpu_custom_call.1} parent=1 // pred_check_branch
      %35 = sbr.rel (0) target = $region13
    $region12: #{tpu_custom_call.1} parent=1 // pred_region
      %36 = dma.done [#allocation4], 1024
    $region13: #{tpu_custom_call.1} parent=1 // pred_fallthru
      _
    // Predicated region
    $region14: #{tpu_custom_call.1} parent=1 // pred_check
      _
    $region15: #{tpu_custom_call.1} parent=1 // pred_check_branch
      %38 = sbr.rel (0) target = $region17
    $region16: #{tpu_custom_call.1} parent=1 // pred_region
      %39 = dma.done [#allocation7], 24576
    $region17: #{tpu_custom_call.1} parent=1 // pred_fallthru
      _
    %40 = vst [vmem:[#allocation2] sm:$0xff] 0.0
    %41 = vst [vmem:[#allocation2 + $0x8] sm:$0xff] 0.0
    %42 = vst [vmem:[#allocation2 + $0x10] sm:$0xff] 0.0
    %43 = vst [vmem:[#allocation2 + $0x18] sm:$0xff] 0.0
    %44 = vst [vmem:[#allocation2 + $0x20] sm:$0x3] 0.0
    %45 = vst [vmem:[#allocation2 + $0x28] sm:$0x3] 0.0
    %46 = vst [vmem:[#allocation2 + $0x30] sm:$0xff] 0.0
    %47 = vst [vmem:[#allocation2 + $0x38] sm:$0xff] 0.0
    %48 = vst [vmem:[#allocation2 + $0x40] sm:$0xff] 0.0
    %49 = vst [vmem:[#allocation2 + $0x48] sm:$0xff] 0.0
    %50 = vst [vmem:[#allocation2 + $0x50] sm:$0x3] 0.0
    %51 = vst [vmem:[#allocation2 + $0x58] sm:$0x3] 0.0
    %v52 = vld [vmem:[#allocation3] sm:$0xff]
    %v53 = vld [vmem:[#allocation3 + $0x8] sm:$0xff]
    %v54 = vld [vmem:[#allocation3 + $0x10] sm:$0xff]
    %v55 = vld [vmem:[#allocation3 + $0x18] sm:$0xff]
    %v56 = vld [vmem:[#allocation3 + $0x20] sm:$0xff]
    %v57 = vld [vmem:[#allocation3 + $0x28] sm:$0xff]
    %v58 = vld [vmem:[#allocation3 + $0x30] sm:$0xff]
    %v59 = vld [vmem:[#allocation3 + $0x38] sm:$0xff]
    %vm68 = vcmask 1040384
    %v69 = vrot.slane %v52, 7
    %v70 = vrot.slane %v53, 7
    %v71 = vrot.slane %v54, 7
    %v72 = vsel %vm68, %v69, %v71
    %v73 = vrot.slane %v55, 7
    %v74 = vsel %vm68, %v70, %v73
    %v75 = vrot.slane %v56, 7
    %v76 = vrot.slane %v57, 7
    %v77 = vrot.slane %v58, 7
    %v78 = vsel %vm68, %v75, %v77
    %v79 = vrot.slane %v59, 7
    %v80 = vsel %vm68, %v76, %v79
    %93 = vst [vmem:[#allocation2] sm:$0xfe] %v69
    %vm94 = vcmask 523265
    %95 = vst.msk [vmem:[#allocation2 + $0x8] sm:$0xfe] %vm94, %v70
    %96 = vst [vmem:[#allocation2 + $0x10] sm:$0xff] %v72
    %vm97 = vcmask 523264
    %98 = vst.msk [vmem:[#allocation2 + $0x18] sm:$0xff] %vm97, %v74
    %99 = vst [vmem:[#allocation2 + $0x20] sm:$0x1] %v71
    %vm100 = vcmask 516096
    %101 = vst.msk [vmem:[#allocation2 + $0x28] sm:$0x1] %vm100, %v73
    %102 = vst [vmem:[#allocation2 + $0x30] sm:$0xfe] %v75
    %103 = vst.msk [vmem:[#allocation2 + $0x38] sm:$0xfe] %vm94, %v76
    %104 = vst [vmem:[#allocation2 + $0x40] sm:$0xff] %v78
    %105 = vst.msk [vmem:[#allocation2 + $0x48] sm:$0xff] %vm97, %v80
    %106 = vst [vmem:[#allocation2 + $0x50] sm:$0x1] %v77
    %107 = vst.msk [vmem:[#allocation2 + $0x58] sm:$0x1] %vm100, %v79
    %v108 = vld [vmem:[#allocation2] sm:$0xff]
    %v109 = vld [vmem:[#allocation2 + $0x8] sm:$0xff]
    %v110 = vld [vmem:[#allocation2 + $0x10] sm:$0xff]
    %v111 = vld [vmem:[#allocation2 + $0x18] sm:$0xff]
    %v112 = vld [vmem:[#allocation2 + $0x30] sm:$0xff]
    %v113 = vld [vmem:[#allocation2 + $0x38] sm:$0xff]
    %v114 = vld [vmem:[#allocation2 + $0x40] sm:$0xff]
    %v115 = vld [vmem:[#allocation2 + $0x48] sm:$0xff]
    %v116 = vld [vmem:[#allocation6] sm:$0xff]
    %v117 = vld [vmem:[#allocation6 + $0x8] sm:$0xff]
    %v118 = vld [vmem:[#allocation6 + $0x10] sm:$0xff]
    %v119 = vld [vmem:[#allocation6 + $0x18] sm:$0xff]
    %v120 = vld [vmem:[#allocation6 + $0x20] sm:$0xff]
    %v121 = vld [vmem:[#allocation6 + $0x28] sm:$0xff]
    %v122 = vld [vmem:[#allocation6 + $0x30] sm:$0xff]
    %v123 = vld [vmem:[#allocation6 + $0x38] sm:$0xff]
    %v124 = vld [vmem:[#allocation6 + $0x40] sm:$0xff]
    %v125 = vld [vmem:[#allocation6 + $0x48] sm:$0xff]
    %v126 = vld [vmem:[#allocation6 + $0x50] sm:$0xff]
    %v127 = vld [vmem:[#allocation6 + $0x58] sm:$0xff]
    %v128 = vld [vmem:[#allocation6 + $0x60] sm:$0xff]
    %v129 = vld [vmem:[#allocation6 + $0x68] sm:$0xff]
    %v130 = vld [vmem:[#allocation6 + $0x70] sm:$0xff]
    %v131 = vld [vmem:[#allocation6 + $0x78] sm:$0xff]
    %v132 = vld [vmem:[#allocation6 + $0x80] sm:$0xff]
    %v133 = vld [vmem:[#allocation6 + $0x88] sm:$0xff]
    %v134 = vld [vmem:[#allocation6 + $0x90] sm:$0xff]
    %v135 = vld [vmem:[#allocation6 + $0x98] sm:$0xff]
    %v136 = vld [vmem:[#allocation6 + $0xa0] sm:$0xff]
    %v137 = vld [vmem:[#allocation6 + $0xa8] sm:$0xff]
    %v138 = vld [vmem:[#allocation6 + $0xb0] sm:$0xff]
    %v139 = vld [vmem:[#allocation6 + $0xb8] sm:$0xff]
    %v140 = vld [vmem:[#allocation6 + $0xc0] sm:$0xff]
    %v141 = vld [vmem:[#allocation6 + $0xc8] sm:$0xff]
    %v142 = vld [vmem:[#allocation6 + $0xd0] sm:$0xff]
    %v143 = vld [vmem:[#allocation6 + $0xd8] sm:$0xff]
    %v144 = vld [vmem:[#allocation6 + $0xe0] sm:$0xff]
    %v145 = vld [vmem:[#allocation6 + $0xe8] sm:$0xff]
    %v146 = vld [vmem:[#allocation6 + $0xf0] sm:$0xff]
    %v147 = vld [vmem:[#allocation6 + $0xf8] sm:$0xff]
    %v148 = vld [vmem:[#allocation6 + $0x100] sm:$0xff]
    %v149 = vld [vmem:[#allocation6 + $0x108] sm:$0xff]
    %v150 = vld [vmem:[#allocation6 + $0x110] sm:$0xff]
    %v151 = vld [vmem:[#allocation6 + $0x118] sm:$0xff]
    %v152 = vld [vmem:[#allocation6 + $0x120] sm:$0xff]
    %v153 = vld [vmem:[#allocation6 + $0x128] sm:$0xff]
    %v154 = vld [vmem:[#allocation6 + $0x130] sm:$0xff]
    %v155 = vld [vmem:[#allocation6 + $0x138] sm:$0xff]
    %v156 = vld [vmem:[#allocation6 + $0x140] sm:$0xff]
    %v157 = vld [vmem:[#allocation6 + $0x148] sm:$0xff]
    %v158 = vld [vmem:[#allocation6 + $0x150] sm:$0xff]
    %v159 = vld [vmem:[#allocation6 + $0x158] sm:$0xff]
    %v160 = vld [vmem:[#allocation6 + $0x160] sm:$0xff]
    %v161 = vld [vmem:[#allocation6 + $0x168] sm:$0xff]
    %v162 = vld [vmem:[#allocation6 + $0x170] sm:$0xff]
    %v163 = vld [vmem:[#allocation6 + $0x178] sm:$0xff]
    %v164 = vld [vmem:[#allocation6 + $0x180] sm:$0xff]
    %v165 = vld [vmem:[#allocation6 + $0x188] sm:$0xff]
    %v166 = vld [vmem:[#allocation6 + $0x190] sm:$0xff]
    %v167 = vld [vmem:[#allocation6 + $0x198] sm:$0xff]
    %v168 = vld [vmem:[#allocation6 + $0x1a0] sm:$0xff]
    %v169 = vld [vmem:[#allocation6 + $0x1a8] sm:$0xff]
    %v170 = vld [vmem:[#allocation6 + $0x1b0] sm:$0xff]
    %v171 = vld [vmem:[#allocation6 + $0x1b8] sm:$0xff]
    %v172 = vld [vmem:[#allocation6 + $0x1c0] sm:$0xff]
    %v173 = vld [vmem:[#allocation6 + $0x1c8] sm:$0xff]
    %v174 = vld [vmem:[#allocation6 + $0x1d0] sm:$0xff]
    %v175 = vld [vmem:[#allocation6 + $0x1d8] sm:$0xff]
    %v176 = vld [vmem:[#allocation6 + $0x1e0] sm:$0xff]
    %v177 = vld [vmem:[#allocation6 + $0x1e8] sm:$0xff]
    %v178 = vld [vmem:[#allocation6 + $0x1f0] sm:$0xff]
    %v179 = vld [vmem:[#allocation6 + $0x1f8] sm:$0xff]
    %v180 = vld [vmem:[#allocation2] sm:$0xfe]
    %v181 = vld [vmem:[#allocation2 + $0x8] sm:$0xfe]
    %v182 = vld [vmem:[#allocation2 + $0x20] sm:$0x1]
    %v183 = vld [vmem:[#allocation2 + $0x28] sm:$0x1]
    %v184 = vld [vmem:[#allocation2 + $0x30] sm:$0xfe]
    %v185 = vld [vmem:[#allocation2 + $0x38] sm:$0xfe]
    %v186 = vld [vmem:[#allocation2 + $0x50] sm:$0x1]
    %v187 = vld [vmem:[#allocation2 + $0x58] sm:$0x1]
    %vm200 = vcmask 1046528
    %v201 = vrot.slane %v180, 1
    %v202 = vrot.slane %v110, 1
    %v203 = vsel %vm200, %v201, %v202
    %v204 = vrot.slane %v181, 1
    %v205 = vrot.slane %v111, 1
    %v206 = vsel %vm200, %v204, %v205
    %v207 = vrot.slane %v182, 1
    %v208 = vsel %vm200, %v202, %v207
    %v209 = vrot.slane %v183, 1
    %v210 = vsel %vm200, %v205, %v209
    %v211 = vrot.slane %v184, 1
    %v212 = vrot.slane %v114, 1
    %v213 = vsel %vm200, %v211, %v212
    %v214 = vrot.slane %v185, 1
    %v215 = vrot.slane %v115, 1
    %v216 = vsel %vm200, %v214, %v215
    %v217 = vrot.slane %v186, 1
    %v218 = vsel %vm200, %v212, %v217
    %v219 = vrot.slane %v187, 1
    %v220 = vsel %vm200, %v215, %v219
    %s229 = scalar_lea.vmem [#allocation6], 512
    %v230 = vld [vmem:[%s229] sm:$0xff]
    %v231 = vld [vmem:[%s229 + $0x8] sm:$0xff]
    %v232 = vld [vmem:[%s229 + $0x10] sm:$0xff]
    %v233 = vld [vmem:[%s229 + $0x18] sm:$0xff]
    %v234 = vld [vmem:[%s229 + $0x20] sm:$0xff]
    %v235 = vld [vmem:[%s229 + $0x28] sm:$0xff]
    %v236 = vld [vmem:[%s229 + $0x30] sm:$0xff]
    %v237 = vld [vmem:[%s229 + $0x38] sm:$0xff]
    %v238 = vld [vmem:[%s229 + $0x40] sm:$0xff]
    %v239 = vld [vmem:[%s229 + $0x48] sm:$0xff]
    %v240 = vld [vmem:[%s229 + $0x50] sm:$0xff]
    %v241 = vld [vmem:[%s229 + $0x58] sm:$0xff]
    %v242 = vld [vmem:[%s229 + $0x60] sm:$0xff]
    %v243 = vld [vmem:[%s229 + $0x68] sm:$0xff]
    %v244 = vld [vmem:[%s229 + $0x70] sm:$0xff]
    %v245 = vld [vmem:[%s229 + $0x78] sm:$0xff]
    %v246 = vld [vmem:[%s229 + $0x80] sm:$0xff]
    %v247 = vld [vmem:[%s229 + $0x88] sm:$0xff]
    %v248 = vld [vmem:[%s229 + $0x90] sm:$0xff]
    %v249 = vld [vmem:[%s229 + $0x98] sm:$0xff]
    %v250 = vld [vmem:[%s229 + $0xa0] sm:$0xff]
    %v251 = vld [vmem:[%s229 + $0xa8] sm:$0xff]
    %v252 = vld [vmem:[%s229 + $0xb0] sm:$0xff]
    %v253 = vld [vmem:[%s229 + $0xb8] sm:$0xff]
    %v254 = vld [vmem:[%s229 + $0xc0] sm:$0xff]
    %v255 = vld [vmem:[%s229 + $0xc8] sm:$0xff]
    %v256 = vld [vmem:[%s229 + $0xd0] sm:$0xff]
    %v257 = vld [vmem:[%s229 + $0xd8] sm:$0xff]
    %v258 = vld [vmem:[%s229 + $0xe0] sm:$0xff]
    %v259 = vld [vmem:[%s229 + $0xe8] sm:$0xff]
    %v260 = vld [vmem:[%s229 + $0xf0] sm:$0xff]
    %v261 = vld [vmem:[%s229 + $0xf8] sm:$0xff]
    %v262 = vld [vmem:[%s229 + $0x100] sm:$0xff]
    %v263 = vld [vmem:[%s229 + $0x108] sm:$0xff]
    %v264 = vld [vmem:[%s229 + $0x110] sm:$0xff]
    %v265 = vld [vmem:[%s229 + $0x118] sm:$0xff]
    %v266 = vld [vmem:[%s229 + $0x120] sm:$0xff]
    %v267 = vld [vmem:[%s229 + $0x128] sm:$0xff]
    %v268 = vld [vmem:[%s229 + $0x130] sm:$0xff]
    %v269 = vld [vmem:[%s229 + $0x138] sm:$0xff]
    %v270 = vld [vmem:[%s229 + $0x140] sm:$0xff]
    %v271 = vld [vmem:[%s229 + $0x148] sm:$0xff]
    %v272 = vld [vmem:[%s229 + $0x150] sm:$0xff]
    %v273 = vld [vmem:[%s229 + $0x158] sm:$0xff]
    %v274 = vld [vmem:[%s229 + $0x160] sm:$0xff]
    %v275 = vld [vmem:[%s229 + $0x168] sm:$0xff]
    %v276 = vld [vmem:[%s229 + $0x170] sm:$0xff]
    %v277 = vld [vmem:[%s229 + $0x178] sm:$0xff]
    %v278 = vld [vmem:[%s229 + $0x180] sm:$0xff]
    %v279 = vld [vmem:[%s229 + $0x188] sm:$0xff]
    %v280 = vld [vmem:[%s229 + $0x190] sm:$0xff]
    %v281 = vld [vmem:[%s229 + $0x198] sm:$0xff]
    %v282 = vld [vmem:[%s229 + $0x1a0] sm:$0xff]
    %v283 = vld [vmem:[%s229 + $0x1a8] sm:$0xff]
    %v284 = vld [vmem:[%s229 + $0x1b0] sm:$0xff]
    %v285 = vld [vmem:[%s229 + $0x1b8] sm:$0xff]
    %v286 = vld [vmem:[%s229 + $0x1c0] sm:$0xff]
    %v287 = vld [vmem:[%s229 + $0x1c8] sm:$0xff]
    %v288 = vld [vmem:[%s229 + $0x1d0] sm:$0xff]
    %v289 = vld [vmem:[%s229 + $0x1d8] sm:$0xff]
    %v290 = vld [vmem:[%s229 + $0x1e0] sm:$0xff]
    %v291 = vld [vmem:[%s229 + $0x1e8] sm:$0xff]
    %v292 = vld [vmem:[%s229 + $0x1f0] sm:$0xff]
    %v293 = vld [vmem:[%s229 + $0x1f8] sm:$0xff]
    %294 = vmatprep.subr.mxu0 %v231
    %295 = vmatpush1.msra.mxu0 %v230
    %296 = vmatprep.subr.mxu0 %v233
    %297 = vmatpush1.msra.mxu0 %v232
    %298 = vmatprep.subr.mxu0 %v235
    %299 = vmatpush1.msra.mxu0 %v234
    %300 = vmatprep.subr.mxu0 %v237
    %301 = vmatpush1.msra.mxu0 %v236
    %302 = vmatprep.subr.mxu0 %v239
    %303 = vmatpush1.msra.mxu0 %v238
    %304 = vmatprep.subr.mxu0 %v241
    %305 = vmatpush1.msra.mxu0 %v240
    %306 = vmatprep.subr.mxu0 %v243
    %307 = vmatpush1.msra.mxu0 %v242
    %308 = vmatprep.subr.mxu0 %v245
    %309 = vmatpush1.msra.mxu0 %v244
    %310 = vmatprep.subr.mxu0 %v247
    %311 = vmatpush1.msra.mxu0 %v246
    %312 = vmatprep.subr.mxu0 %v249
    %313 = vmatpush1.msra.mxu0 %v248
    %314 = vmatprep.subr.mxu0 %v251
    %315 = vmatpush1.msra.mxu0 %v250
    %316 = vmatprep.subr.mxu0 %v253
    %317 = vmatpush1.msra.mxu0 %v252
    %318 = vmatprep.subr.mxu0 %v255
    %319 = vmatpush1.msra.mxu0 %v254
    %320 = vmatprep.subr.mxu0 %v257
    %321 = vmatpush1.msra.mxu0 %v256
    %322 = vmatprep.subr.mxu0 %v259
    %323 = vmatpush1.msra.mxu0 %v258
    %324 = vmatprep.subr.mxu0 %v261
    %325 = vmatpush1.msra.mxu0 %v260
    %326 = vmatprep.subr.mxu0 %v263
    %327 = vmatpush1.msra.mxu0 %v262
    %328 = vmatprep.subr.mxu0 %v265
    %329 = vmatpush1.msra.mxu0 %v264
    %330 = vmatprep.subr.mxu0 %v267
    %331 = vmatpush1.msra.mxu0 %v266
    %332 = vmatprep.subr.mxu0 %v269
    %333 = vmatpush1.msra.mxu0 %v268
    %334 = vmatprep.subr.mxu0 %v271
    %335 = vmatpush1.msra.mxu0 %v270
    %336 = vmatprep.subr.mxu0 %v273
    %337 = vmatpush1.msra.mxu0 %v272
    %338 = vmatprep.subr.mxu0 %v275
    %339 = vmatpush1.msra.mxu0 %v274
    %340 = vmatprep.subr.mxu0 %v277
    %341 = vmatpush1.msra.mxu0 %v276
    %342 = vmatprep.subr.mxu0 %v279
    %343 = vmatpush1.msra.mxu0 %v278
    %344 = vmatprep.subr.mxu0 %v281
    %345 = vmatpush1.msra.mxu0 %v280
    %346 = vmatprep.subr.mxu0 %v283
    %347 = vmatpush1.msra.mxu0 %v282
    %348 = vmatprep.subr.mxu0 %v285
    %349 = vmatpush1.msra.mxu0 %v284
    %350 = vmatprep.subr.mxu0 %v287
    %351 = vmatpush1.msra.mxu0 %v286
    %352 = vmatprep.subr.mxu0 %v289
    %353 = vmatpush1.msra.mxu0 %v288
    %354 = vmatprep.subr.mxu0 %v291
    %355 = vmatpush1.msra.mxu0 %v290
    %356 = vmatprep.subr.mxu0 %v293
    %357 = vmatpush1.msra.mxu0 %v292
    %358 = vmatprep.mubr.f32.mxu0 %v206
    %359 = vmatmul.mubr.f32.gmra.mrb[0].mxu0 %v203
    %v360 = vpop.f32.mrb[0].mxu0
    %v361 = vadd.f32 0.0, %v360
    %v362 = vpop.f32.mrb[0].mxu0
    %v363 = vadd.f32 0.0, %v362
    %364 = vmatprep.mubr.f32.mxu0 %v210
    %365 = vmatmul.mubr.f32.gmra.mrb[0].mxu0 %v208
    %v366 = vpop.f32.mrb[0].mxu0
    %v367 = vadd.f32 0.0, %v366
    %v368 = vpop.f32.mrb[0].mxu0
    %v369 = vadd.f32 0.0, %v368
    %370 = vmatprep.mubr.f32.mxu0 %v216
    %371 = vmatmul.mubr.f32.gmra.mrb[0].mxu0 %v213
    %v372 = vpop.f32.mrb[0].mxu0
    %v373 = vadd.f32 0.0, %v372
    %v374 = vpop.f32.mrb[0].mxu0
    %v375 = vadd.f32 0.0, %v374
    %376 = vmatprep.mubr.f32.mxu0 %v220
    %377 = vmatmul.mubr.f32.gmra.mrb[0].mxu0 %v218
    %v378 = vpop.f32.mrb[0].mxu0
    %v379 = vadd.f32 0.0, %v378
    %v380 = vpop.f32.mrb[0].mxu0
    %v381 = vadd.f32 0.0, %v380
    %382 = vdwg.mxu0
    %383 = vmatprep.subr.mxu0 %v117
    %384 = vmatpush1.msra.mxu0 %v116
    %385 = vmatprep.subr.mxu0 %v119
    %386 = vmatpush1.msra.mxu0 %v118
    %387 = vmatprep.subr.mxu0 %v121
    %388 = vmatpush1.msra.mxu0 %v120
    %389 = vmatprep.subr.mxu0 %v123
    %390 = vmatpush1.msra.mxu0 %v122
    %391 = vmatprep.subr.mxu0 %v125
    %392 = vmatpush1.msra.mxu0 %v124
    %393 = vmatprep.subr.mxu0 %v127
    %394 = vmatpush1.msra.mxu0 %v126
    %395 = vmatprep.subr.mxu0 %v129
    %396 = vmatpush1.msra.mxu0 %v128
    %397 = vmatprep.subr.mxu0 %v131
    %398 = vmatpush1.msra.mxu0 %v130
    %399 = vmatprep.subr.mxu0 %v133
    %400 = vmatpush1.msra.mxu0 %v132
    %401 = vmatprep.subr.mxu0 %v135
    %402 = vmatpush1.msra.mxu0 %v134
    %403 = vmatprep.subr.mxu0 %v137
    %404 = vmatpush1.msra.mxu0 %v136
    %405 = vmatprep.subr.mxu0 %v139
    %406 = vmatpush1.msra.mxu0 %v138
    %407 = vmatprep.subr.mxu0 %v141
    %408 = vmatpush1.msra.mxu0 %v140
    %409 = vmatprep.subr.mxu0 %v143
    %410 = vmatpush1.msra.mxu0 %v142
    %411 = vmatprep.subr.mxu0 %v145
    %412 = vmatpush1.msra.mxu0 %v144
    %413 = vmatprep.subr.mxu0 %v147
    %414 = vmatpush1.msra.mxu0 %v146
    %415 = vmatprep.subr.mxu0 %v149
    %416 = vmatpush1.msra.mxu0 %v148
    %417 = vmatprep.subr.mxu0 %v151
    %418 = vmatpush1.msra.mxu0 %v150
    %419 = vmatprep.subr.mxu0 %v153
    %420 = vmatpush1.msra.mxu0 %v152
    %421 = vmatprep.subr.mxu0 %v155
    %422 = vmatpush1.msra.mxu0 %v154
    %423 = vmatprep.subr.mxu0 %v157
    %424 = vmatpush1.msra.mxu0 %v156
    %425 = vmatprep.subr.mxu0 %v159
    %426 = vmatpush1.msra.mxu0 %v158
    %427 = vmatprep.subr.mxu0 %v161
    %428 = vmatpush1.msra.mxu0 %v160
    %429 = vmatprep.subr.mxu0 %v163
    %430 = vmatpush1.msra.mxu0 %v162
    %431 = vmatprep.subr.mxu0 %v165
    %432 = vmatpush1.msra.mxu0 %v164
    %433 = vmatprep.subr.mxu0 %v167
    %434 = vmatpush1.msra.mxu0 %v166
    %435 = vmatprep.subr.mxu0 %v169
    %436 = vmatpush1.msra.mxu0 %v168
    %437 = vmatprep.subr.mxu0 %v171
    %438 = vmatpush1.msra.mxu0 %v170
    %439 = vmatprep.subr.mxu0 %v173
    %440 = vmatpush1.msra.mxu0 %v172
    %441 = vmatprep.subr.mxu0 %v175
    %442 = vmatpush1.msra.mxu0 %v174
    %443 = vmatprep.subr.mxu0 %v177
    %444 = vmatpush1.msra.mxu0 %v176
    %445 = vmatprep.subr.mxu0 %v179
    %446 = vmatpush1.msra.mxu0 %v178
    %447 = vmatprep.mubr.f32.mxu0 %v109
    %448 = vmatmul.mubr.f32.gmra.mrb[0].mxu0 %v108
    %v449 = vpop.f32.mrb[0].mxu0
    %v450 = vadd.f32 %v361, %v449
    %v451 = vpop.f32.mrb[0].mxu0
    %v452 = vadd.f32 %v363, %v451
    %453 = vmatprep.mubr.f32.mxu0 %v111
    %454 = vmatmul.mubr.f32.gmra.mrb[0].mxu0 %v110
    %v455 = vpop.f32.mrb[0].mxu0
    %v456 = vadd.f32 %v367, %v455
    %v457 = vpop.f32.mrb[0].mxu0
    %v458 = vadd.f32 %v369, %v457
    %459 = vmatprep.mubr.f32.mxu0 %v113
    %460 = vmatmul.mubr.f32.gmra.mrb[0].mxu0 %v112
    %v461 = vpop.f32.mrb[0].mxu0
    %v462 = vadd.f32 %v373, %v461
    %v463 = vpop.f32.mrb[0].mxu0
    %v464 = vadd.f32 %v375, %v463
    %465 = vmatprep.mubr.f32.mxu0 %v115
    %466 = vmatmul.mubr.f32.gmra.mrb[0].mxu0 %v114
    %v467 = vpop.f32.mrb[0].mxu0
    %v468 = vadd.f32 %v379, %v467
    %v469 = vpop.f32.mrb[0].mxu0
    %v470 = vadd.f32 %v381, %v469
    %471 = vdwg.mxu0
    %v472 = vld [vmem:[#allocation2] sm:$0xfc]
    %v473 = vld [vmem:[#allocation2 + $0x8] sm:$0xfc]
    %v474 = vld [vmem:[#allocation2 + $0x20] sm:$0x3]
    %v475 = vld [vmem:[#allocation2 + $0x28] sm:$0x3]
    %v476 = vld [vmem:[#allocation2 + $0x30] sm:$0xfc]
    %v477 = vld [vmem:[#allocation2 + $0x38] sm:$0xfc]
    %v478 = vld [vmem:[#allocation2 + $0x50] sm:$0x3]
    %v479 = vld [vmem:[#allocation2 + $0x58] sm:$0x3]
    %vm488 = vcmask 1045504
    %v489 = vrot.slane %v472, 2
    %v490 = vrot.slane %v110, 2
    %v491 = vsel %vm488, %v489, %v490
    %v492 = vrot.slane %v473, 2
    %v493 = vrot.slane %v111, 2
    %v494 = vsel %vm488, %v492, %v493
    %v495 = vrot.slane %v474, 2
    %v496 = vsel %vm488, %v490, %v495
    %v497 = vrot.slane %v475, 2
    %v498 = vsel %vm488, %v493, %v497
    %v499 = vrot.slane %v476, 2
    %v500 = vrot.slane %v114, 2
    %v501 = vsel %vm488, %v499, %v500
    %v502 = vrot.slane %v477, 2
    %v503 = vrot.slane %v115, 2
    %v504 = vsel %vm488, %v502, %v503
    %v505 = vrot.slane %v478, 2
    %v506 = vsel %vm488, %v500, %v505
    %v507 = vrot.slane %v479, 2
    %v508 = vsel %vm488, %v503, %v507
    %s517 = scalar_lea.vmem [#allocation6], 1024
    %v518 = vld [vmem:[%s517] sm:$0xff]
    %v519 = vld [vmem:[%s517 + $0x8] sm:$0xff]
    %v520 = vld [vmem:[%s517 + $0x10] sm:$0xff]
    %v521 = vld [vmem:[%s517 + $0x18] sm:$0xff]
    %v522 = vld [vmem:[%s517 + $0x20] sm:$0xff]
    %v523 = vld [vmem:[%s517 + $0x28] sm:$0xff]
    %v524 = vld [vmem:[%s517 + $0x30] sm:$0xff]
    %v525 = vld [vmem:[%s517 + $0x38] sm:$0xff]
    %v526 = vld [vmem:[%s517 + $0x40] sm:$0xff]
    %v527 = vld [vmem:[%s517 + $0x48] sm:$0xff]
    %v528 = vld [vmem:[%s517 + $0x50] sm:$0xff]
    %v529 = vld [vmem:[%s517 + $0x58] sm:$0xff]
    %v530 = vld [vmem:[%s517 + $0x60] sm:$0xff]
    %v531 = vld [vmem:[%s517 + $0x68] sm:$0xff]
    %v532 = vld [vmem:[%s517 + $0x70] sm:$0xff]
    %v533 = vld [vmem:[%s517 + $0x78] sm:$0xff]
    %v534 = vld [vmem:[%s517 + $0x80] sm:$0xff]
    %v535 = vld [vmem:[%s517 + $0x88] sm:$0xff]
    %v536 = vld [vmem:[%s517 + $0x90] sm:$0xff]
    %v537 = vld [vmem:[%s517 + $0x98] sm:$0xff]
    %v538 = vld [vmem:[%s517 + $0xa0] sm:$0xff]
    %v539 = vld [vmem:[%s517 + $0xa8] sm:$0xff]
    %v540 = vld [vmem:[%s517 + $0xb0] sm:$0xff]
    %v541 = vld [vmem:[%s517 + $0xb8] sm:$0xff]
    %v542 = vld [vmem:[%s517 + $0xc0] sm:$0xff]
    %v543 = vld [vmem:[%s517 + $0xc8] sm:$0xff]
    %v544 = vld [vmem:[%s517 + $0xd0] sm:$0xff]
    %v545 = vld [vmem:[%s517 + $0xd8] sm:$0xff]
    %v546 = vld [vmem:[%s517 + $0xe0] sm:$0xff]
    %v547 = vld [vmem:[%s517 + $0xe8] sm:$0xff]
    %v548 = vld [vmem:[%s517 + $0xf0] sm:$0xff]
    %v549 = vld [vmem:[%s517 + $0xf8] sm:$0xff]
    %v550 = vld [vmem:[%s517 + $0x100] sm:$0xff]
    %v551 = vld [vmem:[%s517 + $0x108] sm:$0xff]
    %v552 = vld [vmem:[%s517 + $0x110] sm:$0xff]
    %v553 = vld [vmem:[%s517 + $0x118] sm:$0xff]
    %v554 = vld [vmem:[%s517 + $0x120] sm:$0xff]
    %v555 = vld [vmem:[%s517 + $0x128] sm:$0xff]
    %v556 = vld [vmem:[%s517 + $0x130] sm:$0xff]
    %v557 = vld [vmem:[%s517 + $0x138] sm:$0xff]
    %v558 = vld [vmem:[%s517 + $0x140] sm:$0xff]
    %v559 = vld [vmem:[%s517 + $0x148] sm:$0xff]
    %v560 = vld [vmem:[%s517 + $0x150] sm:$0xff]
    %v561 = vld [vmem:[%s517 + $0x158] sm:$0xff]
    %v562 = vld [vmem:[%s517 + $0x160] sm:$0xff]
    %v563 = vld [vmem:[%s517 + $0x168] sm:$0xff]
    %v564 = vld [vmem:[%s517 + $0x170] sm:$0xff]
    %v565 = vld [vmem:[%s517 + $0x178] sm:$0xff]
    %v566 = vld [vmem:[%s517 + $0x180] sm:$0xff]
    %v567 = vld [vmem:[%s517 + $0x188] sm:$0xff]
    %v568 = vld [vmem:[%s517 + $0x190] sm:$0xff]
    %v569 = vld [vmem:[%s517 + $0x198] sm:$0xff]
    %v570 = vld [vmem:[%s517 + $0x1a0] sm:$0xff]
    %v571 = vld [vmem:[%s517 + $0x1a8] sm:$0xff]
    %v572 = vld [vmem:[%s517 + $0x1b0] sm:$0xff]
    %v573 = vld [vmem:[%s517 + $0x1b8] sm:$0xff]
    %v574 = vld [vmem:[%s517 + $0x1c0] sm:$0xff]
    %v575 = vld [vmem:[%s517 + $0x1c8] sm:$0xff]
    %v576 = vld [vmem:[%s517 + $0x1d0] sm:$0xff]
    %v577 = vld [vmem:[%s517 + $0x1d8] sm:$0xff]
    %v578 = vld [vmem:[%s517 + $0x1e0] sm:$0xff]
    %v579 = vld [vmem:[%s517 + $0x1e8] sm:$0xff]
    %v580 = vld [vmem:[%s517 + $0x1f0] sm:$0xff]
    %v581 = vld [vmem:[%s517 + $0x1f8] sm:$0xff]
    %582 = vmatprep.subr.mxu0 %v519
    %583 = vmatpush1.msra.mxu0 %v518
    %584 = vmatprep.subr.mxu0 %v521
    %585 = vmatpush1.msra.mxu0 %v520
    %586 = vmatprep.subr.mxu0 %v523
    %587 = vmatpush1.msra.mxu0 %v522
    %588 = vmatprep.subr.mxu0 %v525
    %589 = vmatpush1.msra.mxu0 %v524
    %590 = vmatprep.subr.mxu0 %v527
    %591 = vmatpush1.msra.mxu0 %v526
    %592 = vmatprep.subr.mxu0 %v529
    %593 = vmatpush1.msra.mxu0 %v528
    %594 = vmatprep.subr.mxu0 %v531
    %595 = vmatpush1.msra.mxu0 %v530
    %596 = vmatprep.subr.mxu0 %v533
    %597 = vmatpush1.msra.mxu0 %v532
    %598 = vmatprep.subr.mxu0 %v535
    %599 = vmatpush1.msra.mxu0 %v534
    %600 = vmatprep.subr.mxu0 %v537
    %601 = vmatpush1.msra.mxu0 %v536
    %602 = vmatprep.subr.mxu0 %v539
    %603 = vmatpush1.msra.mxu0 %v538
    %604 = vmatprep.subr.mxu0 %v541
    %605 = vmatpush1.msra.mxu0 %v540
    %606 = vmatprep.subr.mxu0 %v543
    %607 = vmatpush1.msra.mxu0 %v542
    %608 = vmatprep.subr.mxu0 %v545
    %609 = vmatpush1.msra.mxu0 %v544
    %610 = vmatprep.subr.mxu0 %v547
    %611 = vmatpush1.msra.mxu0 %v546
    %612 = vmatprep.subr.mxu0 %v549
    %613 = vmatpush1.msra.mxu0 %v548
    %614 = vmatprep.subr.mxu0 %v551
    %615 = vmatpush1.msra.mxu0 %v550
    %616 = vmatprep.subr.mxu0 %v553
    %617 = vmatpush1.msra.mxu0 %v552
    %618 = vmatprep.subr.mxu0 %v555
    %619 = vmatpush1.msra.mxu0 %v554
    %620 = vmatprep.subr.mxu0 %v557
    %621 = vmatpush1.msra.mxu0 %v556
    %622 = vmatprep.subr.mxu0 %v559
    %623 = vmatpush1.msra.mxu0 %v558
    %624 = vmatprep.subr.mxu0 %v561
    %625 = vmatpush1.msra.mxu0 %v560
    %626 = vmatprep.subr.mxu0 %v563
    %627 = vmatpush1.msra.mxu0 %v562
    %628 = vmatprep.subr.mxu0 %v565
    %629 = vmatpush1.msra.mxu0 %v564
    %630 = vmatprep.subr.mxu0 %v567
    %631 = vmatpush1.msra.mxu0 %v566
    %632 = vmatprep.subr.mxu0 %v569
    %633 = vmatpush1.msra.mxu0 %v568
    %634 = vmatprep.subr.mxu0 %v571
    %635 = vmatpush1.msra.mxu0 %v570
    %636 = vmatprep.subr.mxu0 %v573
    %637 = vmatpush1.msra.mxu0 %v572
    %638 = vmatprep.subr.mxu0 %v575
    %639 = vmatpush1.msra.mxu0 %v574
    %640 = vmatprep.subr.mxu0 %v577
    %641 = vmatpush1.msra.mxu0 %v576
    %642 = vmatprep.subr.mxu0 %v579
    %643 = vmatpush1.msra.mxu0 %v578
    %644 = vmatprep.subr.mxu0 %v581
    %645 = vmatpush1.msra.mxu0 %v580
    %646 = vmatprep.mubr.f32.mxu0 %v494
    %647 = vmatmul.mubr.f32.gmra.mrb[0].mxu0 %v491
    %v648 = vpop.f32.mrb[0].mxu0
    %v649 = vadd.f32 0.0, %v648
    %v650 = vpop.f32.mrb[0].mxu0
    %v651 = vadd.f32 0.0, %v650
    %652 = vmatprep.mubr.f32.mxu0 %v498
    %653 = vmatmul.mubr.f32.gmra.mrb[0].mxu0 %v496
    %v654 = vpop.f32.mrb[0].mxu0
    %v655 = vadd.f32 0.0, %v654
    %v656 = vpop.f32.mrb[0].mxu0
    %v657 = vadd.f32 0.0, %v656
    %658 = vmatprep.mubr.f32.mxu0 %v504
    %659 = vmatmul.mubr.f32.gmra.mrb[0].mxu0 %v501
    %v660 = vpop.f32.mrb[0].mxu0
    %v661 = vadd.f32 0.0, %v660
    %v662 = vpop.f32.mrb[0].mxu0
    %v663 = vadd.f32 0.0, %v662
    %664 = vmatprep.mubr.f32.mxu0 %v508
    %665 = vmatmul.mubr.f32.gmra.mrb[0].mxu0 %v506
    %v666 = vpop.f32.mrb[0].mxu0
    %v667 = vadd.f32 0.0, %v666
    %v668 = vpop.f32.mrb[0].mxu0
    %v669 = vadd.f32 0.0, %v668
    %670 = vdwg.mxu0
    %v671 = vadd.f32 %v450, %v649
    %v672 = vadd.f32 %v452, %v651
    %v673 = vadd.f32 %v456, %v655
    %v674 = vadd.f32 %v458, %v657
    %v675 = vadd.f32 %v462, %v661
    %v676 = vadd.f32 %v464, %v663
    %v677 = vadd.f32 %v468, %v667
    %v678 = vadd.f32 %v470, %v669
    %vm679 = vcmp.gt.f32.partialorder %v671, 0.0
    %vm680 = vcmp.gt.f32.partialorder %v672, 0.0
    %vm681 = vcmp.gt.f32.partialorder %v673, 0.0
    %vm682 = vcmp.gt.f32.partialorder %v674, 0.0
    %vm683 = vcmp.gt.f32.partialorder %v675, 0.0
    %vm684 = vcmp.gt.f32.partialorder %v676, 0.0
    %vm685 = vcmp.gt.f32.partialorder %v677, 0.0
    %vm686 = vcmp.gt.f32.partialorder %v678, 0.0
    %v687 = vmul.f32 %v671, 0.1
    %v688 = vmul.f32 %v672, 0.1
    %v689 = vmul.f32 %v673, 0.1
    %v690 = vmul.f32 %v674, 0.1
    %v691 = vmul.f32 %v675, 0.1
    %v692 = vmul.f32 %v676, 0.1
    %v693 = vmul.f32 %v677, 0.1
    %v694 = vmul.f32 %v678, 0.1
    %v695 = vsel %vm679, %v671, %v687
    %v696 = vsel %vm680, %v672, %v688
    %v697 = vsel %vm681, %v673, %v689
    %v698 = vsel %vm682, %v674, %v690
    %v699 = vsel %vm683, %v675, %v691
    %v700 = vsel %vm684, %v676, %v692
    %v701 = vsel %vm685, %v677, %v693
    %v702 = vsel %vm686, %v678, %v694
    %703 = vst [vmem:[#allocation8] sm:$0xff] %v695
    %704 = vst [vmem:[#allocation8 + $0x8] sm:$0xff] %v696
    %705 = vst [vmem:[#allocation8 + $0x10] sm:$0xff] %v697
    %706 = vst [vmem:[#allocation8 + $0x18] sm:$0xff] %v698
    %707 = vst [vmem:[#allocation8 + $0x20] sm:$0xff] %v699
    %708 = vst [vmem:[#allocation8 + $0x28] sm:$0xff] %v700
    %709 = vst [vmem:[#allocation8 + $0x30] sm:$0xff] %v701
    %710 = vst [vmem:[#allocation8 + $0x38] sm:$0xff] %v702
    // Predicated region
    $region18: #{tpu_custom_call.1} parent=1 // pred_check
      _
    $region19: #{tpu_custom_call.1} parent=1 // pred_check_branch
      %712 = sbr.rel (0) target = $region21
    $region20: #{tpu_custom_call.1} parent=1 // pred_region
      %s714 = ssub.s32 1024, 1024
      %715 = vsyncadd [#allocation5], %s714
      %s716 = sshll.u32 [#allocation8], 4
      %s717 = int_to_ptr.vmem [resolvable:$true] %s716
      %722 = dma.vmem_to_hbm [thread:$0]  %s717, 1024, %s2, [#allocation5], 256, 256, 16
    $region21: #{tpu_custom_call.1} parent=1 // pred_fallthru
      _
    // Predicated region
    $region22: #{tpu_custom_call.1} parent=1 // pred_check
      _
    $region23: #{tpu_custom_call.1} parent=1 // pred_check_branch
      %724 = sbr.rel (0) target = $region25
    $region24: #{tpu_custom_call.1} parent=1 // pred_region
      %725 = dma.done [#allocation5], 1024
    $region25: #{tpu_custom_call.1} parent=1 // pred_fallthru
      _
    %726 = vsyncpa [#allocation4], 1
    %727 = vsyncpa [#allocation7], 1
    %728 = vsyncpa [#allocation5], 1

</llo_original>
